<compile_context>
chip_gen: v5e
topology: v5e:2x2
jax: 0.10.0
libtpu: 0.0.40
codegen_flags: <defaults>
</compile_context>

<pallas_src>
import jax
import jax.numpy as jnp
from jax import lax
from jax.experimental import pallas as pl
from jax.experimental.pallas import tpu as pltpu


def bottleneck_kernel(x_ref, halo_ref, w1_ref, w2_ref, w3_ref,
                      s1_ref, b1_ref, s2_ref, b2_ref, s3_ref, b3_ref,
                      o_ref):
    # x_ref:    (1, TH, W, Cin)  strip of rows [i*TH, (i+1)*TH)
    # halo_ref: (1, 1, 2, W, Cin) rows i*TH-1 and (i+1)*TH (zeros off-image)
    # w1: (Cin, P) bf16   w2: (3, 3, P, P) bf16   w3: (P, Cout) bf16
    # s*/b*: (1, C) folded BN scale/bias, f32.  Cout == Cin (identity residual)
    _, TH, W, Cin = x_ref.shape
    P = w1_ref.shape[1]
    Cout = w3_ref.shape[1]

    # ---- conv1 (1x1) + bn1 + relu, on the strip plus its 1-row halos ----
    x_top = halo_ref[0, 0, 0][None]                               # (1, W, Cin)
    x_bot = halo_ref[0, 0, 1][None]                               # (1, W, Cin)
    x_ext = jnp.concatenate([x_top, x_ref[0], x_bot], axis=0)     # (TH+2, W, Cin)

    h1 = jnp.dot(x_ext.reshape((TH + 2) * W, Cin).astype(jnp.bfloat16),
                 w1_ref[...], preferred_element_type=jnp.float32)
    h1 = jnp.maximum(h1 * s1_ref[...] + b1_ref[...], 0.0)
    h1 = h1.reshape(TH + 2, W, P)                                 # f32

    # conv2's zero padding lives in h1-space: zero the halo rows that fall
    # outside the image (only first / last row strip of each image).
    ti = pl.program_id(1)
    top_ok = ti > 0
    bot_ok = ti < pl.num_programs(1) - 1
    row = lax.broadcasted_iota(jnp.int32, (TH + 2, W, P), 0)
    keep = ((row > 0) | top_ok) & ((row < TH + 1) | bot_ok)
    h1 = jnp.where(keep, h1, 0.0)

    # ---- conv2 (3x3, stride 1, pad 1) + bn2 + relu: 9 shifted matmuls ----
    # Pre-shift along W once per direction (XLU roll + boundary column mask).
    col = lax.broadcasted_iota(jnp.int32, (TH + 2, W, P), 1)
    h1_xm1 = jnp.where(col >= 1, pltpu.roll(h1, shift=1, axis=1), 0.0)      # h1[:, x-1]
    h1_xp1 = jnp.where(col < W - 1, pltpu.roll(h1, shift=W - 1, axis=1), 0.0)  # h1[:, x+1]
    shifted = (h1_xm1, h1, h1_xp1)                                # indexed by dx

    acc = jnp.zeros((TH * W, P), jnp.float32)
    for dy in range(3):
        for dx in range(3):
            win = shifted[dx][dy:dy + TH]                         # (TH, W, P), aligned row slice
            acc = acc + jnp.dot(win.reshape(TH * W, P).astype(jnp.bfloat16),
                                w2_ref[dy, dx],
                                preferred_element_type=jnp.float32)
    h2 = jnp.maximum(acc * s2_ref[...] + b2_ref[...], 0.0)        # (TH*W, P) f32

    # ---- conv3 (1x1) + bn3 ----
    h3 = jnp.dot(h2.astype(jnp.bfloat16), w3_ref[...],
                 preferred_element_type=jnp.float32)
    h3 = h3 * s3_ref[...] + b3_ref[...]                           # (TH*W, Cout)

    # ---- residual add + relu (re-read x from the resident input block) ----
    out = jnp.maximum(h3 + x_ref[0].reshape(TH * W, Cin), 0.0)
    o_ref[0] = out.reshape(TH, W, Cout).astype(o_ref.dtype)


def bottleneck_pallas(x_nhwc, params, *, tile_h=8):
    """x_nhwc: (N, H, W, Cin) float32 (channels-last).  Returns NHWC."""
    w1, w2, w3, s1, b1, s2, b2, s3, b3 = params
    N, H, W, Cin = x_nhwc.shape
    P = w1.shape[1]
    Cout = w3.shape[1]
    assert Cout == Cin, "identity residual requires inplanes == planes*4"
    assert H % tile_h == 0
    nt = H // tile_h

    # Per-tile 1-row top/bottom halos (zeros off-image).  Tiny (2/tile_h of x)
    # and keeps the kernel on the plain BlockSpec pipeline (no manual DMA).
    x_pad = jnp.pad(x_nhwc, ((0, 0), (1, 1), (0, 0), (0, 0)))
    top = x_pad[:, 0:nt * tile_h:tile_h]                 # x[i*th - 1]
    bot = x_pad[:, tile_h + 1:nt * tile_h + 2:tile_h]    # x[(i+1)*th]
    halos = jnp.stack([top, bot], axis=2)                # (N, nt, 2, W, Cin)

    def resident(a):                                     # weights / BN: stay in VMEM
        nd = a.ndim
        return pl.BlockSpec(a.shape, lambda n, i: (0,) * nd)

    return pl.pallas_call(
        bottleneck_kernel,
        out_shape=jax.ShapeDtypeStruct((N, H, W, Cout), x_nhwc.dtype),
        grid_spec=pltpu.PrefetchScalarGridSpec(
            num_scalar_prefetch=0,
            grid=(N, nt),
            in_specs=[
                pl.BlockSpec((1, tile_h, W, Cin), lambda n, i: (n, i, 0, 0)),
                pl.BlockSpec((1, 1, 2, W, Cin), lambda n, i: (n, i, 0, 0, 0)),
                resident(w1), resident(w2), resident(w3),
                resident(s1), resident(b1),
                resident(s2), resident(b2),
                resident(s3), resident(b3),
            ],
            out_specs=pl.BlockSpec((1, tile_h, W, Cout),
                                   lambda n, i: (n, i, 0, 0)),
        ),
        compiler_params=pltpu.CompilerParams(
            dimension_semantics=("parallel", "parallel"),
            vmem_limit_bytes=32 * 1024 * 1024),
    )(x_nhwc, halos, w1, w2, w3, s1, b1, s2, b2, s3, b3)


# ----------------------- parameter construction --------------------------

def fold_bn(gamma, beta, mean, var, eps=1e-5):
    scale = gamma / jnp.sqrt(var + eps)
    bias = beta - mean * scale
    return scale.reshape(1, -1), bias.reshape(1, -1)


def make_params(key, inplanes, planes):
    expansion = 4
    ks = jax.random.split(key, 6)

    # PyTorch conv weights are (O, I, kH, kW).  Round them to bf16 values so
    # the kernel (bf16 MXU operands) and the f32 reference share weights.
    def w_init(k, shape):
        w = 0.05 * jax.random.normal(k, shape, jnp.float32)
        return w.astype(jnp.bfloat16).astype(jnp.float32)

    w1_oihw = w_init(ks[0], (planes, inplanes, 1, 1))
    w2_oihw = w_init(ks[1], (planes, planes, 3, 3))
    w3_oihw = w_init(ks[2], (planes * expansion, planes, 1, 1))

    w1 = jnp.transpose(w1_oihw[:, :, 0, 0], (1, 0)).astype(jnp.bfloat16)  # (Cin, P)
    w2 = jnp.transpose(w2_oihw, (2, 3, 1, 0)).astype(jnp.bfloat16)        # (3,3,I,O)
    w3 = jnp.transpose(w3_oihw[:, :, 0, 0], (1, 0)).astype(jnp.bfloat16)  # (P, Cout)

    def bn(k, c):
        kk = jax.random.split(k, 4)
        gamma = 1.0 + 0.1 * jax.random.normal(kk[0], (c,))
        beta = 0.1 * jax.random.normal(kk[1], (c,))
        mean = 0.1 * jax.random.normal(kk[2], (c,))
        var = jnp.abs(jax.random.normal(kk[3], (c,))) + 0.5
        return fold_bn(gamma, beta, mean, var)

    s1, b1 = bn(ks[3], planes)
    s2, b2 = bn(ks[4], planes)
    s3, b3 = bn(ks[5], planes * expansion)

    kernel_params = (w1, w2, w3,
                     s1.astype(jnp.float32), b1.astype(jnp.float32),
                     s2.astype(jnp.float32), b2.astype(jnp.float32),
                     s3.astype(jnp.float32), b3.astype(jnp.float32))
    ref_conv_w = (w1_oihw, w2_oihw, w3_oihw)
    bn_folded = (s1, b1, s2, b2, s3, b3)
    return kernel_params, ref_conv_w, bn_folded


# --------------------------- pure-JAX reference ---------------------------

def bottleneck_ref(x, conv_w, bn_folded):
    w1, w2, w3 = conv_w
    s1, b1, s2, b2, s3, b3 = bn_folded
    dn = ("NCHW", "OIHW", "NCHW")

    def affine(o, s, b):
        return o * s.reshape(1, -1, 1, 1) + b.reshape(1, -1, 1, 1)

    out = lax.conv_general_dilated(x, w1, (1, 1), "VALID", dimension_numbers=dn)
    out = jnp.maximum(affine(out, s1, b1), 0.0)
    out = lax.conv_general_dilated(out, w2, (1, 1), ((1, 1), (1, 1)),
                                   dimension_numbers=dn)
    out = jnp.maximum(affine(out, s2, b2), 0.0)
    out = lax.conv_general_dilated(out, w3, (1, 1), "VALID", dimension_numbers=dn)
    out = affine(out, s3, b3)
    return jnp.maximum(out + x, 0.0)


if __name__ == "__main__":
    # Bottleneck with downsample=None, stride=1 requires inplanes == planes*4.
    planes = 32
    inplanes = planes * 4      # 128 -> lane-dense residual/output channels
    N, H, W = 2, 16, 16

    key = jax.random.PRNGKey(0)
    kx, kp = jax.random.split(key)
    x_nchw = jax.random.normal(kx, (N, inplanes, H, W), dtype=jnp.float32)

    kernel_params, conv_w, bn_folded = make_params(kp, inplanes, planes)

    # Kernel is NHWC-native; convert only here to check against the
    # PyTorch-layout (NCHW) reference.
    x_nhwc = jnp.transpose(x_nchw, (0, 2, 3, 1))
    out_nhwc = jax.block_until_ready(
        bottleneck_pallas(x_nhwc, kernel_params, tile_h=8))
    out = jnp.transpose(out_nhwc, (0, 3, 1, 2))

    ref = bottleneck_ref(x_nchw, conv_w, bn_folded)
    assert out.shape == (N, inplanes, H, W)
    err = float(jnp.max(jnp.abs(out - ref)))
    # bf16 MXU operands with f32 accumulation -> looser tolerance than pure f32.
    assert err < 5e-2, f"mismatch vs. JAX reference: max abs err = {err}"

    print("KERNEL_OK")
</pallas_src>

<mosaic_0001>
module attributes {stable_mosaic.version = 11 : i64} {
  func.func @bottleneck_kernel(%arg0: i32, %arg1: i32, %arg2: memref<1x8x16x128xf32, #tpu.memory_space<vmem>>, %arg3: memref<1x1x2x16x128xf32, #tpu.memory_space<vmem>>, %arg4: memref<128x32xbf16, #tpu.memory_space<vmem>>, %arg5: memref<3x3x32x32xbf16, #tpu.memory_space<vmem>>, %arg6: memref<32x128xbf16, #tpu.memory_space<vmem>>, %arg7: memref<1x32xf32, #tpu.memory_space<vmem>>, %arg8: memref<1x32xf32, #tpu.memory_space<vmem>>, %arg9: memref<1x32xf32, #tpu.memory_space<vmem>>, %arg10: memref<1x32xf32, #tpu.memory_space<vmem>>, %arg11: memref<1x128xf32, #tpu.memory_space<vmem>>, %arg12: memref<1x128xf32, #tpu.memory_space<vmem>>, %arg13: memref<1x8x16x128xf32, #tpu.memory_space<vmem>>) attributes {dimension_semantics = [#tpu.dimension_semantics<parallel>, #tpu.dimension_semantics<parallel>], iteration_bounds = array<i64: 2, 2>, scalar_prefetch = 0 : i64, scratch_operands = 0 : i64, tpu.core_type = #tpu.core_type<tc>, window_params = [{transform_indices = @transform_0, window_bounds = array<i64: 1, 8, 16, 128>}, {transform_indices = @transform_1, window_bounds = array<i64: 1, 1, 2, 16, 128>}, {pipeline_mode = #tpu.pipeline_mode<synchronous>, transform_indices = @transform_2, window_bounds = array<i64: 128, 32>}, {pipeline_mode = #tpu.pipeline_mode<synchronous>, transform_indices = @transform_3, window_bounds = array<i64: 3, 3, 32, 32>}, {pipeline_mode = #tpu.pipeline_mode<synchronous>, transform_indices = @transform_4, window_bounds = array<i64: 32, 128>}, {pipeline_mode = #tpu.pipeline_mode<synchronous>, transform_indices = @transform_5, window_bounds = array<i64: 1, 32>}, {pipeline_mode = #tpu.pipeline_mode<synchronous>, transform_indices = @transform_6, window_bounds = array<i64: 1, 32>}, {pipeline_mode = #tpu.pipeline_mode<synchronous>, transform_indices = @transform_7, window_bounds = array<i64: 1, 32>}, {pipeline_mode = #tpu.pipeline_mode<synchronous>, transform_indices = @transform_8, window_bounds = array<i64: 1, 32>}, {pipeline_mode = #tpu.pipeline_mode<synchronous>, transform_indices = @transform_9, window_bounds = array<i64: 1, 128>}, {pipeline_mode = #tpu.pipeline_mode<synchronous>, transform_indices = @transform_10, window_bounds = array<i64: 1, 128>}, {transform_indices = @transform_11, window_bounds = array<i64: 1, 8, 16, 128>}]} {
    %c0 = arith.constant 0 : index
    %c0_0 = arith.constant 0 : index
    %c0_1 = arith.constant 0 : index
    %c0_2 = arith.constant 0 : index
    %c0_3 = arith.constant 0 : index
    %0 = vector.load %arg3[%c0, %c0_0, %c0_1, %c0_2, %c0_3] : memref<1x1x2x16x128xf32, #tpu.memory_space<vmem>>, vector<1x1x1x16x128xf32>
    %1 = vector.shape_cast %0 : vector<1x1x1x16x128xf32> to vector<16x128xf32>
    %2 = vector.shape_cast %1 : vector<16x128xf32> to vector<1x16x128xf32>
    %c0_4 = arith.constant 0 : index
    %c0_5 = arith.constant 0 : index
    %c1 = arith.constant 1 : index
    %c0_6 = arith.constant 0 : index
    %c0_7 = arith.constant 0 : index
    %3 = vector.load %arg3[%c0_4, %c0_5, %c1, %c0_6, %c0_7] : memref<1x1x2x16x128xf32, #tpu.memory_space<vmem>>, vector<1x1x1x16x128xf32>
    %4 = vector.shape_cast %3 : vector<1x1x1x16x128xf32> to vector<16x128xf32>
    %5 = vector.shape_cast %4 : vector<16x128xf32> to vector<1x16x128xf32>
    %c0_8 = arith.constant 0 : index
    %c0_9 = arith.constant 0 : index
    %c0_10 = arith.constant 0 : index
    %c0_11 = arith.constant 0 : index
    %6 = vector.load %arg2[%c0_8, %c0_9, %c0_10, %c0_11] : memref<1x8x16x128xf32, #tpu.memory_space<vmem>>, vector<1x8x16x128xf32>
    %7 = vector.shape_cast %6 : vector<1x8x16x128xf32> to vector<8x16x128xf32>
    %8 = tpu.concatenate %2, %7, %5 in 0 : vector<1x16x128xf32>, vector<8x16x128xf32>, vector<1x16x128xf32> -> vector<10x16x128xf32>
    %9 = vector.shape_cast %8 : vector<10x16x128xf32> to vector<160x128xf32>
    %10 = arith.truncf %9 : vector<160x128xf32> to vector<160x128xbf16>
    %c0_12 = arith.constant 0 : index
    %c0_13 = arith.constant 0 : index
    %11 = vector.load %arg4[%c0_12, %c0_13] : memref<128x32xbf16, #tpu.memory_space<vmem>>, vector<128x32xbf16>
    %cst = arith.constant dense<0.000000e+00> : vector<160x32xf32>
    %12 = tpu.matmul %10, %11, %cst {dimension_numbers = #tpu.dot_dimension_numbers<[1], [0], [0], [1], [0, 0, 1, 1], [], []>} : vector<160x128xbf16>, vector<128x32xbf16>, vector<160x32xf32> -> vector<160x32xf32>
    %c0_14 = arith.constant 0 : index
    %c0_15 = arith.constant 0 : index
    %13 = vector.load %arg7[%c0_14, %c0_15] : memref<1x32xf32, #tpu.memory_space<vmem>>, vector<1x32xf32>
    %14 = vector.broadcast %13 : vector<1x32xf32> to vector<160x32xf32>
    %15 = arith.mulf %12, %14 : vector<160x32xf32>
    %c0_16 = arith.constant 0 : index
    %c0_17 = arith.constant 0 : index
    %16 = vector.load %arg8[%c0_16, %c0_17] : memref<1x32xf32, #tpu.memory_space<vmem>>, vector<1x32xf32>
    %17 = vector.broadcast %16 : vector<1x32xf32> to vector<160x32xf32>
    %18 = arith.addf %15, %17 : vector<160x32xf32>
    %cst_18 = arith.constant 0.000000e+00 : f32
    %19 = vector.broadcast %cst_18 : f32 to vector<160x32xf32>
    %20 = arith.maximumf %18, %19 : vector<160x32xf32>
    %21 = vector.shape_cast %20 : vector<160x32xf32> to vector<10x16x32xf32>
    %c0_i32 = arith.constant 0 : i32
    %22 = arith.cmpi sgt, %arg1, %c0_i32 : i32
    %c1_i32 = arith.constant 1 : i32
    %23 = arith.cmpi slt, %arg1, %c1_i32 : i32
    %24 = tpu.iota {dimensions = array<i32: 0>} : vector<10x16x32xi32>
    %c0_i32_19 = arith.constant 0 : i32
    %25 = vector.broadcast %c0_i32_19 : i32 to vector<10x16x32xi32>
    %26 = arith.cmpi sgt, %24, %25 : vector<10x16x32xi32>
    %27 = vector.broadcast %22 : i1 to vector<10x16x32xi1>
    %28 = arith.ori %26, %27 : vector<10x16x32xi1>
    %c9_i32 = arith.constant 9 : i32
    %29 = vector.broadcast %c9_i32 : i32 to vector<10x16x32xi32>
    %30 = arith.cmpi slt, %24, %29 : vector<10x16x32xi32>
    %31 = vector.broadcast %23 : i1 to vector<10x16x32xi1>
    %32 = arith.ori %30, %31 : vector<10x16x32xi1>
    %33 = arith.andi %28, %32 : vector<10x16x32xi1>
    %cst_20 = arith.constant 0.000000e+00 : f32
    %34 = vector.broadcast %cst_20 : f32 to vector<10x16x32xf32>
    %35 = arith.select %33, %21, %34 : vector<10x16x32xi1>, vector<10x16x32xf32>
    %36 = tpu.iota {dimensions = array<i32: 1>} : vector<10x16x32xi32>
    %c1_i32_21 = arith.constant 1 : i32
    %37 = vector.broadcast %c1_i32_21 : i32 to vector<10x16x32xi32>
    %38 = arith.cmpi sge, %36, %37 : vector<10x16x32xi32>
    %c1_i32_22 = arith.constant 1 : i32
    %39 = tpu.dynamic_rotate %35 by %c1_i32_22 dim 1 : vector<10x16x32xf32>, i32 -> vector<10x16x32xf32>
    %cst_23 = arith.constant 0.000000e+00 : f32
    %40 = vector.broadcast %cst_23 : f32 to vector<10x16x32xf32>
    %41 = arith.select %38, %39, %40 : vector<10x16x32xi1>, vector<10x16x32xf32>
    %c15_i32 = arith.constant 15 : i32
    %42 = vector.broadcast %c15_i32 : i32 to vector<10x16x32xi32>
    %43 = arith.cmpi slt, %36, %42 : vector<10x16x32xi32>
    %c15_i32_24 = arith.constant 15 : i32
    %44 = tpu.dynamic_rotate %35 by %c15_i32_24 dim 1 : vector<10x16x32xf32>, i32 -> vector<10x16x32xf32>
    %cst_25 = arith.constant 0.000000e+00 : f32
    %45 = vector.broadcast %cst_25 : f32 to vector<10x16x32xf32>
    %46 = arith.select %43, %44, %45 : vector<10x16x32xi1>, vector<10x16x32xf32>
    %cst_26 = arith.constant 0.000000e+00 : f32
    %47 = vector.broadcast %cst_26 : f32 to vector<128x32xf32>
    %48 = vector.extract_strided_slice %41 {offsets = [0, 0, 0], sizes = [8, 16, 32], strides = [1, 1, 1]} : vector<10x16x32xf32> to vector<8x16x32xf32>
    %49 = vector.shape_cast %48 : vector<8x16x32xf32> to vector<128x32xf32>
    %50 = arith.truncf %49 : vector<128x32xf32> to vector<128x32xbf16>
    %c0_27 = arith.constant 0 : index
    %c0_28 = arith.constant 0 : index
    %c0_29 = arith.constant 0 : index
    %c0_30 = arith.constant 0 : index
    %51 = vector.load %arg5[%c0_27, %c0_28, %c0_29, %c0_30] : memref<3x3x32x32xbf16, #tpu.memory_space<vmem>>, vector<1x1x32x32xbf16>
    %52 = vector.shape_cast %51 : vector<1x1x32x32xbf16> to vector<32x32xbf16>
    %cst_31 = arith.constant dense<0.000000e+00> : vector<128x32xf32>
    %53 = tpu.matmul %50, %52, %cst_31 {dimension_numbers = #tpu.dot_dimension_numbers<[1], [0], [0], [1], [0, 0, 1, 1], [], []>} : vector<128x32xbf16>, vector<32x32xbf16>, vector<128x32xf32> -> vector<128x32xf32>
    %54 = arith.addf %47, %53 : vector<128x32xf32>
    %55 = vector.extract_strided_slice %35 {offsets = [0, 0, 0], sizes = [8, 16, 32], strides = [1, 1, 1]} : vector<10x16x32xf32> to vector<8x16x32xf32>
    %56 = vector.shape_cast %55 : vector<8x16x32xf32> to vector<128x32xf32>
    %57 = arith.truncf %56 : vector<128x32xf32> to vector<128x32xbf16>
    %c0_32 = arith.constant 0 : index
    %c1_33 = arith.constant 1 : index
    %c0_34 = arith.constant 0 : index
    %c0_35 = arith.constant 0 : index
    %58 = vector.load %arg5[%c0_32, %c1_33, %c0_34, %c0_35] : memref<3x3x32x32xbf16, #tpu.memory_space<vmem>>, vector<1x1x32x32xbf16>
    %59 = vector.shape_cast %58 : vector<1x1x32x32xbf16> to vector<32x32xbf16>
    %cst_36 = arith.constant dense<0.000000e+00> : vector<128x32xf32>
    %60 = tpu.matmul %57, %59, %cst_36 {dimension_numbers = #tpu.dot_dimension_numbers<[1], [0], [0], [1], [0, 0, 1, 1], [], []>} : vector<128x32xbf16>, vector<32x32xbf16>, vector<128x32xf32> -> vector<128x32xf32>
    %61 = arith.addf %54, %60 : vector<128x32xf32>
    %62 = vector.extract_strided_slice %46 {offsets = [0, 0, 0], sizes = [8, 16, 32], strides = [1, 1, 1]} : vector<10x16x32xf32> to vector<8x16x32xf32>
    %63 = vector.shape_cast %62 : vector<8x16x32xf32> to vector<128x32xf32>
    %64 = arith.truncf %63 : vector<128x32xf32> to vector<128x32xbf16>
    %c0_37 = arith.constant 0 : index
    %c2 = arith.constant 2 : index
    %c0_38 = arith.constant 0 : index
    %c0_39 = arith.constant 0 : index
    %65 = vector.load %arg5[%c0_37, %c2, %c0_38, %c0_39] : memref<3x3x32x32xbf16, #tpu.memory_space<vmem>>, vector<1x1x32x32xbf16>
    %66 = vector.shape_cast %65 : vector<1x1x32x32xbf16> to vector<32x32xbf16>
    %cst_40 = arith.constant dense<0.000000e+00> : vector<128x32xf32>
    %67 = tpu.matmul %64, %66, %cst_40 {dimension_numbers = #tpu.dot_dimension_numbers<[1], [0], [0], [1], [0, 0, 1, 1], [], []>} : vector<128x32xbf16>, vector<32x32xbf16>, vector<128x32xf32> -> vector<128x32xf32>
    %68 = arith.addf %61, %67 : vector<128x32xf32>
    %69 = vector.extract_strided_slice %41 {offsets = [1, 0, 0], sizes = [8, 16, 32], strides = [1, 1, 1]} : vector<10x16x32xf32> to vector<8x16x32xf32>
    %70 = vector.shape_cast %69 : vector<8x16x32xf32> to vector<128x32xf32>
    %71 = arith.truncf %70 : vector<128x32xf32> to vector<128x32xbf16>
    %c1_41 = arith.constant 1 : index
    %c0_42 = arith.constant 0 : index
    %c0_43 = arith.constant 0 : index
    %c0_44 = arith.constant 0 : index
    %72 = vector.load %arg5[%c1_41, %c0_42, %c0_43, %c0_44] : memref<3x3x32x32xbf16, #tpu.memory_space<vmem>>, vector<1x1x32x32xbf16>
    %73 = vector.shape_cast %72 : vector<1x1x32x32xbf16> to vector<32x32xbf16>
    %cst_45 = arith.constant dense<0.000000e+00> : vector<128x32xf32>
    %74 = tpu.matmul %71, %73, %cst_45 {dimension_numbers = #tpu.dot_dimension_numbers<[1], [0], [0], [1], [0, 0, 1, 1], [], []>} : vector<128x32xbf16>, vector<32x32xbf16>, vector<128x32xf32> -> vector<128x32xf32>
    %75 = arith.addf %68, %74 : vector<128x32xf32>
    %76 = vector.extract_strided_slice %35 {offsets = [1, 0, 0], sizes = [8, 16, 32], strides = [1, 1, 1]} : vector<10x16x32xf32> to vector<8x16x32xf32>
    %77 = vector.shape_cast %76 : vector<8x16x32xf32> to vector<128x32xf32>
    %78 = arith.truncf %77 : vector<128x32xf32> to vector<128x32xbf16>
    %c1_46 = arith.constant 1 : index
    %c1_47 = arith.constant 1 : index
    %c0_48 = arith.constant 0 : index
    %c0_49 = arith.constant 0 : index
    %79 = vector.load %arg5[%c1_46, %c1_47, %c0_48, %c0_49] : memref<3x3x32x32xbf16, #tpu.memory_space<vmem>>, vector<1x1x32x32xbf16>
    %80 = vector.shape_cast %79 : vector<1x1x32x32xbf16> to vector<32x32xbf16>
    %cst_50 = arith.constant dense<0.000000e+00> : vector<128x32xf32>
    %81 = tpu.matmul %78, %80, %cst_50 {dimension_numbers = #tpu.dot_dimension_numbers<[1], [0], [0], [1], [0, 0, 1, 1], [], []>} : vector<128x32xbf16>, vector<32x32xbf16>, vector<128x32xf32> -> vector<128x32xf32>
    %82 = arith.addf %75, %81 : vector<128x32xf32>
    %83 = vector.extract_strided_slice %46 {offsets = [1, 0, 0], sizes = [8, 16, 32], strides = [1, 1, 1]} : vector<10x16x32xf32> to vector<8x16x32xf32>
    %84 = vector.shape_cast %83 : vector<8x16x32xf32> to vector<128x32xf32>
    %85 = arith.truncf %84 : vector<128x32xf32> to vector<128x32xbf16>
    %c1_51 = arith.constant 1 : index
    %c2_52 = arith.constant 2 : index
    %c0_53 = arith.constant 0 : index
    %c0_54 = arith.constant 0 : index
    %86 = vector.load %arg5[%c1_51, %c2_52, %c0_53, %c0_54] : memref<3x3x32x32xbf16, #tpu.memory_space<vmem>>, vector<1x1x32x32xbf16>
    %87 = vector.shape_cast %86 : vector<1x1x32x32xbf16> to vector<32x32xbf16>
    %cst_55 = arith.constant dense<0.000000e+00> : vector<128x32xf32>
    %88 = tpu.matmul %85, %87, %cst_55 {dimension_numbers = #tpu.dot_dimension_numbers<[1], [0], [0], [1], [0, 0, 1, 1], [], []>} : vector<128x32xbf16>, vector<32x32xbf16>, vector<128x32xf32> -> vector<128x32xf32>
    %89 = arith.addf %82, %88 : vector<128x32xf32>
    %90 = vector.extract_strided_slice %41 {offsets = [2, 0, 0], sizes = [8, 16, 32], strides = [1, 1, 1]} : vector<10x16x32xf32> to vector<8x16x32xf32>
    %91 = vector.shape_cast %90 : vector<8x16x32xf32> to vector<128x32xf32>
    %92 = arith.truncf %91 : vector<128x32xf32> to vector<128x32xbf16>
    %c2_56 = arith.constant 2 : index
    %c0_57 = arith.constant 0 : index
    %c0_58 = arith.constant 0 : index
    %c0_59 = arith.constant 0 : index
    %93 = vector.load %arg5[%c2_56, %c0_57, %c0_58, %c0_59] : memref<3x3x32x32xbf16, #tpu.memory_space<vmem>>, vector<1x1x32x32xbf16>
    %94 = vector.shape_cast %93 : vector<1x1x32x32xbf16> to vector<32x32xbf16>
    %cst_60 = arith.constant dense<0.000000e+00> : vector<128x32xf32>
    %95 = tpu.matmul %92, %94, %cst_60 {dimension_numbers = #tpu.dot_dimension_numbers<[1], [0], [0], [1], [0, 0, 1, 1], [], []>} : vector<128x32xbf16>, vector<32x32xbf16>, vector<128x32xf32> -> vector<128x32xf32>
    %96 = arith.addf %89, %95 : vector<128x32xf32>
    %97 = vector.extract_strided_slice %35 {offsets = [2, 0, 0], sizes = [8, 16, 32], strides = [1, 1, 1]} : vector<10x16x32xf32> to vector<8x16x32xf32>
    %98 = vector.shape_cast %97 : vector<8x16x32xf32> to vector<128x32xf32>
    %99 = arith.truncf %98 : vector<128x32xf32> to vector<128x32xbf16>
    %c2_61 = arith.constant 2 : index
    %c1_62 = arith.constant 1 : index
    %c0_63 = arith.constant 0 : index
    %c0_64 = arith.constant 0 : index
    %100 = vector.load %arg5[%c2_61, %c1_62, %c0_63, %c0_64] : memref<3x3x32x32xbf16, #tpu.memory_space<vmem>>, vector<1x1x32x32xbf16>
    %101 = vector.shape_cast %100 : vector<1x1x32x32xbf16> to vector<32x32xbf16>
    %cst_65 = arith.constant dense<0.000000e+00> : vector<128x32xf32>
    %102 = tpu.matmul %99, %101, %cst_65 {dimension_numbers = #tpu.dot_dimension_numbers<[1], [0], [0], [1], [0, 0, 1, 1], [], []>} : vector<128x32xbf16>, vector<32x32xbf16>, vector<128x32xf32> -> vector<128x32xf32>
    %103 = arith.addf %96, %102 : vector<128x32xf32>
    %104 = vector.extract_strided_slice %46 {offsets = [2, 0, 0], sizes = [8, 16, 32], strides = [1, 1, 1]} : vector<10x16x32xf32> to vector<8x16x32xf32>
    %105 = vector.shape_cast %104 : vector<8x16x32xf32> to vector<128x32xf32>
    %106 = arith.truncf %105 : vector<128x32xf32> to vector<128x32xbf16>
    %c2_66 = arith.constant 2 : index
    %c2_67 = arith.constant 2 : index
    %c0_68 = arith.constant 0 : index
    %c0_69 = arith.constant 0 : index
    %107 = vector.load %arg5[%c2_66, %c2_67, %c0_68, %c0_69] : memref<3x3x32x32xbf16, #tpu.memory_space<vmem>>, vector<1x1x32x32xbf16>
    %108 = vector.shape_cast %107 : vector<1x1x32x32xbf16> to vector<32x32xbf16>
    %cst_70 = arith.constant dense<0.000000e+00> : vector<128x32xf32>
    %109 = tpu.matmul %106, %108, %cst_70 {dimension_numbers = #tpu.dot_dimension_numbers<[1], [0], [0], [1], [0, 0, 1, 1], [], []>} : vector<128x32xbf16>, vector<32x32xbf16>, vector<128x32xf32> -> vector<128x32xf32>
    %110 = arith.addf %103, %109 : vector<128x32xf32>
    %c0_71 = arith.constant 0 : index
    %c0_72 = arith.constant 0 : index
    %111 = vector.load %arg9[%c0_71, %c0_72] : memref<1x32xf32, #tpu.memory_space<vmem>>, vector<1x32xf32>
    %112 = vector.broadcast %111 : vector<1x32xf32> to vector<128x32xf32>
    %113 = arith.mulf %110, %112 : vector<128x32xf32>
    %c0_73 = arith.constant 0 : index
    %c0_74 = arith.constant 0 : index
    %114 = vector.load %arg10[%c0_73, %c0_74] : memref<1x32xf32, #tpu.memory_space<vmem>>, vector<1x32xf32>
    %115 = vector.broadcast %114 : vector<1x32xf32> to vector<128x32xf32>
    %116 = arith.addf %113, %115 : vector<128x32xf32>
    %cst_75 = arith.constant 0.000000e+00 : f32
    %117 = vector.broadcast %cst_75 : f32 to vector<128x32xf32>
    %118 = arith.maximumf %116, %117 : vector<128x32xf32>
    %119 = arith.truncf %118 : vector<128x32xf32> to vector<128x32xbf16>
    %c0_76 = arith.constant 0 : index
    %c0_77 = arith.constant 0 : index
    %120 = vector.load %arg6[%c0_76, %c0_77] : memref<32x128xbf16, #tpu.memory_space<vmem>>, vector<32x128xbf16>
    %cst_78 = arith.constant dense<0.000000e+00> : vector<128x128xf32>
    %121 = tpu.matmul %119, %120, %cst_78 {dimension_numbers = #tpu.dot_dimension_numbers<[1], [0], [0], [1], [0, 0, 1, 1], [], []>} : vector<128x32xbf16>, vector<32x128xbf16>, vector<128x128xf32> -> vector<128x128xf32>
    %c0_79 = arith.constant 0 : index
    %c0_80 = arith.constant 0 : index
    %122 = vector.load %arg11[%c0_79, %c0_80] : memref<1x128xf32, #tpu.memory_space<vmem>>, vector<1x128xf32>
    %123 = vector.broadcast %122 : vector<1x128xf32> to vector<128x128xf32>
    %124 = arith.mulf %121, %123 : vector<128x128xf32>
    %c0_81 = arith.constant 0 : index
    %c0_82 = arith.constant 0 : index
    %125 = vector.load %arg12[%c0_81, %c0_82] : memref<1x128xf32, #tpu.memory_space<vmem>>, vector<1x128xf32>
    %126 = vector.broadcast %125 : vector<1x128xf32> to vector<128x128xf32>
    %127 = arith.addf %124, %126 : vector<128x128xf32>
    %c0_83 = arith.constant 0 : index
    %c0_84 = arith.constant 0 : index
    %c0_85 = arith.constant 0 : index
    %c0_86 = arith.constant 0 : index
    %128 = vector.load %arg2[%c0_83, %c0_84, %c0_85, %c0_86] : memref<1x8x16x128xf32, #tpu.memory_space<vmem>>, vector<1x8x16x128xf32>
    %129 = vector.shape_cast %128 : vector<1x8x16x128xf32> to vector<8x16x128xf32>
    %130 = vector.shape_cast %129 : vector<8x16x128xf32> to vector<128x128xf32>
    %131 = arith.addf %127, %130 : vector<128x128xf32>
    %cst_87 = arith.constant 0.000000e+00 : f32
    %132 = vector.broadcast %cst_87 : f32 to vector<128x128xf32>
    %133 = arith.maximumf %131, %132 : vector<128x128xf32>
    %134 = vector.shape_cast %133 : vector<128x128xf32> to vector<8x16x128xf32>
    %c0_88 = arith.constant 0 : index
    %c0_89 = arith.constant 0 : index
    %c0_90 = arith.constant 0 : index
    %c0_91 = arith.constant 0 : index
    %135 = vector.load %arg13[%c0_88, %c0_89, %c0_90, %c0_91] : memref<1x8x16x128xf32, #tpu.memory_space<vmem>>, vector<1x8x16x128xf32>
    %136 = vector.shape_cast %135 : vector<1x8x16x128xf32> to vector<8x16x128xf32>
    %137 = vector.shape_cast %134 : vector<8x16x128xf32> to vector<1x8x16x128xf32>
    tpu.vector_store %arg13[%c0_88, %c0_89, %c0_90, %c0_91], %137 {strides = array<i32>} : memref<1x8x16x128xf32, #tpu.memory_space<vmem>>, vector<1x8x16x128xf32>,
    return
  }
  func.func @transform_0(%arg0: i32, %arg1: i32) -> (i32, i32, i32, i32) {
    %c0_i32 = arith.constant 0 : i32
    %c0_i32_0 = arith.constant 0 : i32
    %c0_i32_1 = arith.constant 0 : i32
    return %arg0, %arg1, %c0_i32, %c0_i32_0 : i32, i32, i32, i32
  }
  func.func @transform_1(%arg0: i32, %arg1: i32) -> (i32, i32, i32, i32, i32) {
    %c0_i32 = arith.constant 0 : i32
    %c0_i32_0 = arith.constant 0 : i32
    %c0_i32_1 = arith.constant 0 : i32
    %c0_i32_2 = arith.constant 0 : i32
    return %arg0, %arg1, %c0_i32, %c0_i32_0, %c0_i32_1 : i32, i32, i32, i32, i32
  }
  func.func @transform_2(%arg0: i32, %arg1: i32) -> (i32, i32) {
    %c0_i32 = arith.constant 0 : i32
    %c0_i32_0 = arith.constant 0 : i32
    %c0_i32_1 = arith.constant 0 : i32
    return %c0_i32, %c0_i32_0 : i32, i32
  }
  func.func @transform_3(%arg0: i32, %arg1: i32) -> (i32, i32, i32, i32) {
    %c0_i32 = arith.constant 0 : i32
    %c0_i32_0 = arith.constant 0 : i32
    %c0_i32_1 = arith.constant 0 : i32
    %c0_i32_2 = arith.constant 0 : i32
    %c0_i32_3 = arith.constant 0 : i32
    return %c0_i32, %c0_i32_0, %c0_i32_1, %c0_i32_2 : i32, i32, i32, i32
  }
  func.func @transform_4(%arg0: i32, %arg1: i32) -> (i32, i32) {
    %c0_i32 = arith.constant 0 : i32
    %c0_i32_0 = arith.constant 0 : i32
    %c0_i32_1 = arith.constant 0 : i32
    return %c0_i32, %c0_i32_0 : i32, i32
  }
  func.func @transform_5(%arg0: i32, %arg1: i32) -> (i32, i32) {
    %c0_i32 = arith.constant 0 : i32
    %c0_i32_0 = arith.constant 0 : i32
    %c0_i32_1 = arith.constant 0 : i32
    return %c0_i32, %c0_i32_0 : i32, i32
  }
  func.func @transform_6(%arg0: i32, %arg1: i32) -> (i32, i32) {
    %c0_i32 = arith.constant 0 : i32
    %c0_i32_0 = arith.constant 0 : i32
    %c0_i32_1 = arith.constant 0 : i32
    return %c0_i32, %c0_i32_0 : i32, i32
  }
  func.func @transform_7(%arg0: i32, %arg1: i32) -> (i32, i32) {
    %c0_i32 = arith.constant 0 : i32
    %c0_i32_0 = arith.constant 0 : i32
    %c0_i32_1 = arith.constant 0 : i32
    return %c0_i32, %c0_i32_0 : i32, i32
  }
  func.func @transform_8(%arg0: i32, %arg1: i32) -> (i32, i32) {
    %c0_i32 = arith.constant 0 : i32
    %c0_i32_0 = arith.constant 0 : i32
    %c0_i32_1 = arith.constant 0 : i32
    return %c0_i32, %c0_i32_0 : i32, i32
  }
  func.func @transform_9(%arg0: i32, %arg1: i32) -> (i32, i32) {
    %c0_i32 = arith.constant 0 : i32
    %c0_i32_0 = arith.constant 0 : i32
    %c0_i32_1 = arith.constant 0 : i32
    return %c0_i32, %c0_i32_0 : i32, i32
  }
  func.func @transform_10(%arg0: i32, %arg1: i32) -> (i32, i32) {
    %c0_i32 = arith.constant 0 : i32
    %c0_i32_0 = arith.constant 0 : i32
    %c0_i32_1 = arith.constant 0 : i32
    return %c0_i32, %c0_i32_0 : i32, i32
  }
  func.func @transform_11(%arg0: i32, %arg1: i32) -> (i32, i32, i32, i32) {
    %c0_i32 = arith.constant 0 : i32
    %c0_i32_0 = arith.constant 0 : i32
    %c0_i32_1 = arith.constant 0 : i32
    return %arg0, %arg1, %c0_i32, %c0_i32_0 : i32, i32, i32, i32
  }
}

</mosaic_0001>

<llo_original>
// kernel: tpu_custom_call.1
$region0: #{tpu_custom_call.1}
  #allocation0 [shape = 'u32[]', space=smem, size = 0x4, offset = 0x4, fixed_abs, tag = 'smem constant byte address 0x4 - core index']
  #allocation1 [shape = 'u32[72,128]{1,0:T(1,128)}', space=vmem, size = 0x9000, scoped, tag = 'internal scratch']
  %s0 = inlined_call_operand.hbm [shape: f32[2,16,16,128], index: 0, kind: input, shape index: {}]
  %s1 = inlined_call_operand.hbm [shape: f32[2,2,2,16,128], index: 1, kind: input, shape index: {}]
  %s2 = inlined_call_operand.vmem [shape: bf16[128,32], index: 2, kind: input, shape index: {}]
  %s3 = inlined_call_operand.hbm [shape: bf16[3,3,32,32], index: 3, kind: input, shape index: {}]
  %s4 = inlined_call_operand.vmem [shape: bf16[32,128], index: 4, kind: input, shape index: {}]
  %s5 = inlined_call_operand.vmem [shape: f32[1,32], index: 5, kind: input, shape index: {}]
  %s6 = inlined_call_operand.vmem [shape: f32[1,32], index: 6, kind: input, shape index: {}]
  %s7 = inlined_call_operand.vmem [shape: f32[1,32], index: 7, kind: input, shape index: {}]
  %s8 = inlined_call_operand.vmem [shape: f32[1,32], index: 8, kind: input, shape index: {}]
  %s9 = inlined_call_operand.vmem [shape: f32[1,128], index: 9, kind: input, shape index: {}]
  %s10 = inlined_call_operand.vmem [shape: f32[1,128], index: 10, kind: input, shape index: {}]
  %s11 = inlined_call_operand.hbm [shape: f32[2,16,16,128], index: 11, kind: output, shape index: {}]
  %s12 = sld [smem:[#allocation0]]
  $region89: #{tpu_custom_call.1} parent=0
    _
  %s14 = ssub.s32 1, %s12
  %s15 = scalar_select 0, %s14, %s12
  $region1: #{tpu_custom_call.1} parent=0
    #allocation2 [shape = 'u8[131072]{0}', space=vmem, size = 0x20000, scoped, tag = 'input window, operand 0']
    #allocation3 [shape = 's32[2]{0}', space=sflag, size = 0x8, scoped, tag = 'scoped memory for tpu_custom_call.1']
    #allocation4 [shape = 's32[2]{0}', space=sflag, size = 0x8, scoped, tag = 'scoped memory for tpu_custom_call.1']
    #allocation5 [shape = 'u8[32768]{0}', space=vmem, size = 0x8000, scoped, tag = 'input window, operand 1']
    #allocation6 [shape = 's32[2]{0}', space=sflag, size = 0x8, scoped, tag = 'scoped memory for tpu_custom_call.1']
    #allocation7 [shape = 'u8[73728]{0}', space=vmem, size = 0x12000, scoped, tag = 'input window, operand 3, single buffered']
    #allocation8 [shape = 'u8[131072]{0}', space=vmem, size = 0x20000, scoped, tag = 'output window, operand 0']
    %16 = vsyncpa [#allocation3], 0
    %s17 = scalar_lea.sflag [#allocation3], 1
    %18 = vsyncpa %s17, 0
    %19 = vsyncpa [#allocation6], 0
    %s20 = scalar_lea.sflag [#allocation6], 1
    %21 = vsyncpa %s20, 0
    %22 = vsyncpa [#allocation4], 0
    %s23 = scalar_lea.sflag [#allocation4], 1
    %24 = vsyncpa %s23, 0
    loop: start=0, step=1, limit=6
    $region2: #{tpu_custom_call.1} parent=1 // loop_pre_header
      _
    $region3: #{tpu_custom_call.1} parent=1 // loop_header
      %s26 = sphi 0, %s30
      %p27 = scmp.ge.s32.totalorder %s26, 6
      %s33 = sphi 0, %s45
      %s34 = sphi 0, %s41
      %s35 = sphi 0, %s33
      %s36 = sphi 0, %s34
      %s37 = sphi 0, %s35
      %s38 = sphi 0, %s36
      %s50 = sphi 0, %s52
      %s53 = sphi 0, %s50
      %s54 = sphi 0, %s53
      %s70 = sphi 0, %s54
      %s78 = sphi 0, %s80
      %s81 = sphi 0, %s78
      %s82 = sphi 0, %s81
      %s98 = sphi 0, %s82
      %s102 = sphi 0, %s102
      %s104 = sphi 0, %s102
      %s105 = sphi 0, %s104
      %s119 = sphi 0, %s105
      %s123 = sphi 0, %s123
      %s125 = sphi 0, %s123
      %s126 = sphi 0, %s125
      %s140 = sphi 0, %s126
      %s144 = sphi 0, %s144
      %s146 = sphi 0, %s144
      %s147 = sphi 0, %s146
      %s161 = sphi 0, %s147
      %s165 = sphi 0, %s165
      %s167 = sphi 0, %s165
      %s168 = sphi 0, %s167
      %s182 = sphi 0, %s168
      %s186 = sphi 0, %s186
      %s188 = sphi 0, %s186
      %s189 = sphi 0, %s188
      %s203 = sphi 0, %s189
      %s207 = sphi 0, %s207
      %s209 = sphi 0, %s207
      %s210 = sphi 0, %s209
      %s224 = sphi 0, %s210
      %s228 = sphi 0, %s228
      %s230 = sphi 0, %s228
      %s231 = sphi 0, %s230
      %s245 = sphi 0, %s231
      %s249 = sphi 0, %s249
      %s251 = sphi 0, %s249
      %s252 = sphi 0, %s251
      %s266 = sphi 0, %s252
      %s270 = sphi 0, %s270
      %s272 = sphi 0, %s270
      %s273 = sphi 0, %s272
      %s287 = sphi 0, %s273
      %s295 = sphi 0, %s297
      %s298 = sphi 0, %s295
      %s299 = sphi 0, %s298
      %s315 = sphi 0, %s299
    $region4: #{tpu_custom_call.1} parent=1 // loop_header_branch
      %29 = sbr.rel (%p27) target = $region8
    $region5: #{tpu_custom_call.1} parent=1 // loop_body
      %s31 = ssub.s32 %s26, 1
      %s32 = ssub.s32 %s26, 2
      %s39 = sadd.s32 1, %s34
      %p40 = scmp.ge.s32.totalorder %s39, 2
      %s41 = scalar_select %p40, 0, %s39
      %s42 = sadd.s32 1, %s33
      %s43 = scalar_select %p40, %s42, %s33
      %p44 = scmp.ge.s32.totalorder %s43, 2
      %s45 = scalar_select %p44, 0, %s43
      %s46 = ssub.s32 %s33, %s45
      %s47 = ssub.s32 %s34, %s41
      %s48 = sor.u32 %s46, %s47
      %p49 = scmp.eq.s32.totalorder %s48, 0
      %s51 = sadd.s32 %s50, 1
      %s52 = scalar_select %p49, %s50, %s51
      %p55 = pneg %p49
      %p56 = scmp.eq.s32.totalorder %s26, 3
      %p57 = por %p55, %p56
      %p58 = scmp.ne.s32.totalorder %s50, %s53
      %p59 = scmp.eq.s32.totalorder %s26, 0
      %p60 = por %p58, %p59
      %p61 = scmp.ne.s32.totalorder %s50, %s53
      %p62 = scmp.eq.s32.totalorder %s31, 3
      %p63 = por %p61, %p62
      %p64 = scmp.ne.s32.totalorder %s53, %s54
      %p65 = scmp.eq.s32.totalorder %s31, 0
      %p66 = por %p64, %p65
      %p67 = scmp.ne.s32.totalorder %s53, %s54
      %p68 = scmp.eq.s32.totalorder %s32, 3
      %p69 = por %p67, %p68
      %p71 = scmp.ne.s32.totalorder %s54, %s70
      %p72 = scmp.eq.s32.totalorder %s32, 0
      %p73 = por %p71, %p72
      %s74 = ssub.s32 %s33, %s45
      %s75 = ssub.s32 %s34, %s41
      %s76 = sor.u32 %s74, %s75
      %p77 = scmp.eq.s32.totalorder %s76, 0
      %s79 = sadd.s32 %s78, 1
      %s80 = scalar_select %p77, %s78, %s79
      %p83 = pneg %p77
      %p84 = scmp.eq.s32.totalorder %s26, 3
      %p85 = por %p83, %p84
      %p86 = scmp.ne.s32.totalorder %s78, %s81
      %p87 = scmp.eq.s32.totalorder %s26, 0
      %p88 = por %p86, %p87
      %p89 = scmp.ne.s32.totalorder %s78, %s81
      %p90 = scmp.eq.s32.totalorder %s31, 3
      %p91 = por %p89, %p90
      %p92 = scmp.ne.s32.totalorder %s81, %s82
      %p93 = scmp.eq.s32.totalorder %s31, 0
      %p94 = por %p92, %p93
      %p95 = scmp.ne.s32.totalorder %s81, %s82
      %p96 = scmp.eq.s32.totalorder %s32, 3
      %p97 = por %p95, %p96
      %p99 = scmp.ne.s32.totalorder %s82, %s98
      %p100 = scmp.eq.s32.totalorder %s32, 0
      %p101 = por %p99, %p100
      %s103 = sadd.s32 %s102, 1
      %p106 = scmp.eq.s32.totalorder %s26, 3
      %p107 = scmp.ne.s32.totalorder %s102, %s104
      %p108 = scmp.eq.s32.totalorder %s26, 0
      %p109 = por %p107, %p108
      %p110 = scmp.ne.s32.totalorder %s102, %s104
      %p111 = scmp.eq.s32.totalorder %s31, 3
      %p112 = por %p110, %p111
      %p113 = scmp.ne.s32.totalorder %s104, %s105
      %p114 = scmp.eq.s32.totalorder %s31, 0
      %p115 = por %p113, %p114
      %p116 = scmp.ne.s32.totalorder %s104, %s105
      %p117 = scmp.eq.s32.totalorder %s32, 3
      %p118 = por %p116, %p117
      %p120 = scmp.ne.s32.totalorder %s105, %s119
      %p121 = scmp.eq.s32.totalorder %s32, 0
      %p122 = por %p120, %p121
      %s124 = sadd.s32 %s123, 1
      %p127 = scmp.eq.s32.totalorder %s26, 3
      %p128 = scmp.ne.s32.totalorder %s123, %s125
      %p129 = scmp.eq.s32.totalorder %s26, 0
      %p130 = por %p128, %p129
      %p131 = scmp.ne.s32.totalorder %s123, %s125
      %p132 = scmp.eq.s32.totalorder %s31, 3
      %p133 = por %p131, %p132
      %p134 = scmp.ne.s32.totalorder %s125, %s126
      %p135 = scmp.eq.s32.totalorder %s31, 0
      %p136 = por %p134, %p135
      %p137 = scmp.ne.s32.totalorder %s125, %s126
      %p138 = scmp.eq.s32.totalorder %s32, 3
      %p139 = por %p137, %p138
      %p141 = scmp.ne.s32.totalorder %s126, %s140
      %p142 = scmp.eq.s32.totalorder %s32, 0
      %p143 = por %p141, %p142
      %s145 = sadd.s32 %s144, 1
      %p148 = scmp.eq.s32.totalorder %s26, 3
      %p149 = scmp.ne.s32.totalorder %s144, %s146
      %p150 = scmp.eq.s32.totalorder %s26, 0
      %p151 = por %p149, %p150
      %p152 = scmp.ne.s32.totalorder %s144, %s146
      %p153 = scmp.eq.s32.totalorder %s31, 3
      %p154 = por %p152, %p153
      %p155 = scmp.ne.s32.totalorder %s146, %s147
      %p156 = scmp.eq.s32.totalorder %s31, 0
      %p157 = por %p155, %p156
      %p158 = scmp.ne.s32.totalorder %s146, %s147
      %p159 = scmp.eq.s32.totalorder %s32, 3
      %p160 = por %p158, %p159
      %p162 = scmp.ne.s32.totalorder %s147, %s161
      %p163 = scmp.eq.s32.totalorder %s32, 0
      %p164 = por %p162, %p163
      %s166 = sadd.s32 %s165, 1
      %p169 = scmp.eq.s32.totalorder %s26, 3
      %p170 = scmp.ne.s32.totalorder %s165, %s167
      %p171 = scmp.eq.s32.totalorder %s26, 0
      %p172 = por %p170, %p171
      %p173 = scmp.ne.s32.totalorder %s165, %s167
      %p174 = scmp.eq.s32.totalorder %s31, 3
      %p175 = por %p173, %p174
      %p176 = scmp.ne.s32.totalorder %s167, %s168
      %p177 = scmp.eq.s32.totalorder %s31, 0
      %p178 = por %p176, %p177
      %p179 = scmp.ne.s32.totalorder %s167, %s168
      %p180 = scmp.eq.s32.totalorder %s32, 3
      %p181 = por %p179, %p180
      %p183 = scmp.ne.s32.totalorder %s168, %s182
      %p184 = scmp.eq.s32.totalorder %s32, 0
      %p185 = por %p183, %p184
      %s187 = sadd.s32 %s186, 1
      %p190 = scmp.eq.s32.totalorder %s26, 3
      %p191 = scmp.ne.s32.totalorder %s186, %s188
      %p192 = scmp.eq.s32.totalorder %s26, 0
      %p193 = por %p191, %p192
      %p194 = scmp.ne.s32.totalorder %s186, %s188
      %p195 = scmp.eq.s32.totalorder %s31, 3
      %p196 = por %p194, %p195
      %p197 = scmp.ne.s32.totalorder %s188, %s189
      %p198 = scmp.eq.s32.totalorder %s31, 0
      %p199 = por %p197, %p198
      %p200 = scmp.ne.s32.totalorder %s188, %s189
      %p201 = scmp.eq.s32.totalorder %s32, 3
      %p202 = por %p200, %p201
      %p204 = scmp.ne.s32.totalorder %s189, %s203
      %p205 = scmp.eq.s32.totalorder %s32, 0
      %p206 = por %p204, %p205
      %s208 = sadd.s32 %s207, 1
      %p211 = scmp.eq.s32.totalorder %s26, 3
      %p212 = scmp.ne.s32.totalorder %s207, %s209
      %p213 = scmp.eq.s32.totalorder %s26, 0
      %p214 = por %p212, %p213
      %p215 = scmp.ne.s32.totalorder %s207, %s209
      %p216 = scmp.eq.s32.totalorder %s31, 3
      %p217 = por %p215, %p216
      %p218 = scmp.ne.s32.totalorder %s209, %s210
      %p219 = scmp.eq.s32.totalorder %s31, 0
      %p220 = por %p218, %p219
      %p221 = scmp.ne.s32.totalorder %s209, %s210
      %p222 = scmp.eq.s32.totalorder %s32, 3
      %p223 = por %p221, %p222
      %p225 = scmp.ne.s32.totalorder %s210, %s224
      %p226 = scmp.eq.s32.totalorder %s32, 0
      %p227 = por %p225, %p226
      %s229 = sadd.s32 %s228, 1
      %p232 = scmp.eq.s32.totalorder %s26, 3
      %p233 = scmp.ne.s32.totalorder %s228, %s230
      %p234 = scmp.eq.s32.totalorder %s26, 0
      %p235 = por %p233, %p234
      %p236 = scmp.ne.s32.totalorder %s228, %s230
      %p237 = scmp.eq.s32.totalorder %s31, 3
      %p238 = por %p236, %p237
      %p239 = scmp.ne.s32.totalorder %s230, %s231
      %p240 = scmp.eq.s32.totalorder %s31, 0
      %p241 = por %p239, %p240
      %p242 = scmp.ne.s32.totalorder %s230, %s231
      %p243 = scmp.eq.s32.totalorder %s32, 3
      %p244 = por %p242, %p243
      %p246 = scmp.ne.s32.totalorder %s231, %s245
      %p247 = scmp.eq.s32.totalorder %s32, 0
      %p248 = por %p246, %p247
      %s250 = sadd.s32 %s249, 1
      %p253 = scmp.eq.s32.totalorder %s26, 3
      %p254 = scmp.ne.s32.totalorder %s249, %s251
      %p255 = scmp.eq.s32.totalorder %s26, 0
      %p256 = por %p254, %p255
      %p257 = scmp.ne.s32.totalorder %s249, %s251
      %p258 = scmp.eq.s32.totalorder %s31, 3
      %p259 = por %p257, %p258
      %p260 = scmp.ne.s32.totalorder %s251, %s252
      %p261 = scmp.eq.s32.totalorder %s31, 0
      %p262 = por %p260, %p261
      %p263 = scmp.ne.s32.totalorder %s251, %s252
      %p264 = scmp.eq.s32.totalorder %s32, 3
      %p265 = por %p263, %p264
      %p267 = scmp.ne.s32.totalorder %s252, %s266
      %p268 = scmp.eq.s32.totalorder %s32, 0
      %p269 = por %p267, %p268
      %s271 = sadd.s32 %s270, 1
      %p274 = scmp.eq.s32.totalorder %s26, 3
      %p275 = scmp.ne.s32.totalorder %s270, %s272
      %p276 = scmp.eq.s32.totalorder %s26, 0
      %p277 = por %p275, %p276
      %p278 = scmp.ne.s32.totalorder %s270, %s272
      %p279 = scmp.eq.s32.totalorder %s31, 3
      %p280 = por %p278, %p279
      %p281 = scmp.ne.s32.totalorder %s272, %s273
      %p282 = scmp.eq.s32.totalorder %s31, 0
      %p283 = por %p281, %p282
      %p284 = scmp.ne.s32.totalorder %s272, %s273
      %p285 = scmp.eq.s32.totalorder %s32, 3
      %p286 = por %p284, %p285
      %p288 = scmp.ne.s32.totalorder %s273, %s287
      %p289 = scmp.eq.s32.totalorder %s32, 0
      %p290 = por %p288, %p289
      %s291 = ssub.s32 %s33, %s45
      %s292 = ssub.s32 %s34, %s41
      %s293 = sor.u32 %s291, %s292
      %p294 = scmp.eq.s32.totalorder %s293, 0
      %s296 = sadd.s32 %s295, 1
      %s297 = scalar_select %p294, %s295, %s296
      %p300 = pneg %p294
      %p301 = scmp.eq.s32.totalorder %s26, 3
      %p302 = por %p300, %p301
      %p303 = scmp.ne.s32.totalorder %s295, %s298
      %p304 = scmp.eq.s32.totalorder %s26, 0
      %p305 = por %p303, %p304
      %p306 = scmp.ne.s32.totalorder %s295, %s298
      %p307 = scmp.eq.s32.totalorder %s31, 3
      %p308 = por %p306, %p307
      %p309 = scmp.ne.s32.totalorder %s298, %s299
      %p310 = scmp.eq.s32.totalorder %s31, 0
      %p311 = por %p309, %p310
      %p312 = scmp.ne.s32.totalorder %s298, %s299
      %p313 = scmp.eq.s32.totalorder %s32, 3
      %p314 = por %p312, %p313
      %p316 = scmp.ne.s32.totalorder %s299, %s315
      %p317 = scmp.eq.s32.totalorder %s32, 0
      %p318 = por %p316, %p317
      %p319 = scmp.le.s32.totalorder 1, %s26
      %p320 = scmp.lt.s32.totalorder %s26, 5
      %p321 = pnand %p319, %p320
      %p322 = pneg %p321
      // Predicated region
      $region9: #{tpu_custom_call.1} parent=5 // pred_check
        _
      $region10: #{tpu_custom_call.1} parent=5 // pred_check_branch
        %324 = sbr.rel (%p321) target = $region12
      $region11: #{tpu_custom_call.1} parent=5 // pred_region
        %s325 = ssub.s32 %s26, 1
        // Predicated region
        $region13: #{tpu_custom_call.1} parent=11 // pred_check
          %p326 = pneg %p115
        $region14: #{tpu_custom_call.1} parent=11 // pred_check_branch
          %328 = sbr.rel (%p326) target = $region16
        $region15: #{tpu_custom_call.1} parent=11 // pred_region
          _
        $region16: #{tpu_custom_call.1} parent=11 // pred_fallthru
          _
        // Predicated region
        $region17: #{tpu_custom_call.1} parent=11 // pred_check
          %p329 = pneg %p136
        $region18: #{tpu_custom_call.1} parent=11 // pred_check_branch
          %331 = sbr.rel (%p329) target = $region20
        $region19: #{tpu_custom_call.1} parent=11 // pred_region
          %333 = vsyncadd [#allocation6], 0
          %s334 = sshll.u32 %s3, 4
          %s335 = int_to_ptr.hbm [resolvable:$true] %s334
          %s336 = sshll.u32 [#allocation7], 4
          %s337 = int_to_ptr.vmem [resolvable:$true] %s336
          %342 = dma.hbm_to_vmem [thread:$0]  %s335, 2304, %s337, [#allocation6], 64, 64, 4
        $region20: #{tpu_custom_call.1} parent=11 // pred_fallthru
          _
        // Predicated region
        $region21: #{tpu_custom_call.1} parent=11 // pred_check
          %p343 = pneg %p157
        $region22: #{tpu_custom_call.1} parent=11 // pred_check_branch
          %345 = sbr.rel (%p343) target = $region24
        $region23: #{tpu_custom_call.1} parent=11 // pred_region
          _
        $region24: #{tpu_custom_call.1} parent=11 // pred_fallthru
          _
        // Predicated region
        $region25: #{tpu_custom_call.1} parent=11 // pred_check
          %p346 = pneg %p178
        $region26: #{tpu_custom_call.1} parent=11 // pred_check_branch
          %348 = sbr.rel (%p346) target = $region28
        $region27: #{tpu_custom_call.1} parent=11 // pred_region
          _
        $region28: #{tpu_custom_call.1} parent=11 // pred_fallthru
          _
        // Predicated region
        $region29: #{tpu_custom_call.1} parent=11 // pred_check
          %p349 = pneg %p199
        $region30: #{tpu_custom_call.1} parent=11 // pred_check_branch
          %351 = sbr.rel (%p349) target = $region32
        $region31: #{tpu_custom_call.1} parent=11 // pred_region
          _
        $region32: #{tpu_custom_call.1} parent=11 // pred_fallthru
          _
        // Predicated region
        $region33: #{tpu_custom_call.1} parent=11 // pred_check
          %p352 = pneg %p220
        $region34: #{tpu_custom_call.1} parent=11 // pred_check_branch
          %354 = sbr.rel (%p352) target = $region36
        $region35: #{tpu_custom_call.1} parent=11 // pred_region
          _
        $region36: #{tpu_custom_call.1} parent=11 // pred_fallthru
          _
        // Predicated region
        $region37: #{tpu_custom_call.1} parent=11 // pred_check
          %p355 = pneg %p241
        $region38: #{tpu_custom_call.1} parent=11 // pred_check_branch
          %357 = sbr.rel (%p355) target = $region40
        $region39: #{tpu_custom_call.1} parent=11 // pred_region
          _
        $region40: #{tpu_custom_call.1} parent=11 // pred_fallthru
          _
        // Predicated region
        $region41: #{tpu_custom_call.1} parent=11 // pred_check
          %p358 = pneg %p262
        $region42: #{tpu_custom_call.1} parent=11 // pred_check_branch
          %360 = sbr.rel (%p358) target = $region44
        $region43: #{tpu_custom_call.1} parent=11 // pred_region
          _
        $region44: #{tpu_custom_call.1} parent=11 // pred_fallthru
          _
        // Predicated region
        $region45: #{tpu_custom_call.1} parent=11 // pred_check
          %p361 = pneg %p283
        $region46: #{tpu_custom_call.1} parent=11 // pred_check_branch
          %363 = sbr.rel (%p361) target = $region48
        $region47: #{tpu_custom_call.1} parent=11 // pred_region
          _
        $region48: #{tpu_custom_call.1} parent=11 // pred_fallthru
          _
      $region12: #{tpu_custom_call.1} parent=5 // pred_fallthru
        _
      %p364 = scmp.lt.s32.totalorder %s26, 4
      // Predicated region
      $region49: #{tpu_custom_call.1} parent=5 // pred_check
        %p365 = pneg %p364
      $region50: #{tpu_custom_call.1} parent=5 // pred_check_branch
        %367 = sbr.rel (%p365) target = $region52
      $region51: #{tpu_custom_call.1} parent=5 // pred_region
        // Predicated region
        $region53: #{tpu_custom_call.1} parent=51 // pred_check
          %p368 = pneg %p60
        $region54: #{tpu_custom_call.1} parent=51 // pred_check_branch
          %370 = sbr.rel (%p368) target = $region56
        $region55: #{tpu_custom_call.1} parent=51 // pred_region
          %s371 = sand.u32 %s50, 1
          %s372 = scalar_lea.sflag [#allocation3], %s371
          %s373 = sand.u32 %s50, 1
          %s374 = smul.addr %s373, 128
          %s375 = scalar_lea.vmem [#allocation2], %s374
          %s376 = smul.u32 8, %s34
          %378 = vsyncadd %s372, 0
          %s379 = smul.addr %s376, 2
          %s380 = smul.addr %s33, 32
          %s381 = sadd.s32 %s379, %s380
          %s382 = smul.addr %s381, 8
          %s383 = scalar_lea.hbm %s0, %s382
          %s384 = sshll.u32 %s383, 4
          %s385 = int_to_ptr.hbm [resolvable:$true] %s384
          %s386 = sshll.u32 %s375, 4
          %s387 = int_to_ptr.vmem [resolvable:$true] %s386
          %392 = dma.hbm_to_vmem [thread:$0]  %s385, 2048, %s387, %s372, 128, 128, 8
        $region56: #{tpu_custom_call.1} parent=51 // pred_fallthru
          _
        // Predicated region
        $region57: #{tpu_custom_call.1} parent=51 // pred_check
          %p393 = pneg %p88
        $region58: #{tpu_custom_call.1} parent=51 // pred_check_branch
          %395 = sbr.rel (%p393) target = $region60
        $region59: #{tpu_custom_call.1} parent=51 // pred_region
          %s396 = sand.u32 %s26, 1
          %s397 = scalar_lea.sflag [#allocation6], %s396
          %s398 = sand.u32 %s78, 1
          %s399 = smul.addr %s398, 32
          %s400 = scalar_lea.vmem [#allocation5], %s399
          %402 = vsyncadd %s397, 0
          %s403 = smul.addr %s34, 4
          %s404 = smul.addr %s33, 8
          %s405 = sadd.s32 %s403, %s404
          %s406 = smul.addr %s405, 8
          %s407 = scalar_lea.hbm %s1, %s406
          %s408 = sshll.u32 %s407, 4
          %s409 = int_to_ptr.hbm [resolvable:$true] %s408
          %s410 = sshll.u32 %s400, 4
          %s411 = int_to_ptr.vmem [resolvable:$true] %s410
          %416 = dma.hbm_to_vmem [thread:$0]  %s409, 512, %s411, %s397, 128, 128, 8
        $region60: #{tpu_custom_call.1} parent=51 // pred_fallthru
          _
      $region52: #{tpu_custom_call.1} parent=5 // pred_fallthru
        _
      %p417 = scmp.le.s32.totalorder 1, %s26
      %p418 = scmp.lt.s32.totalorder %s26, 5
      %p419 = pnand %p417, %p418
      %p420 = pneg %p419
      // Predicated region
      $region61: #{tpu_custom_call.1} parent=5 // pred_check
        _
      $region62: #{tpu_custom_call.1} parent=5 // pred_check_branch
        %422 = sbr.rel (%p419) target = $region64
      $region63: #{tpu_custom_call.1} parent=5 // pred_region
        %s423 = ssub.s32 %s26, 1
        %s424 = sand.u32 %s53, 1
        %s425 = scalar_lea.sflag [#allocation3], %s424
        %s426 = sand.u32 %s53, 1
        %s427 = smul.addr %s426, 128
        %s428 = scalar_lea.vmem [#allocation2], %s427
        // Predicated region
        $region65: #{tpu_custom_call.1} parent=63 // pred_check
          %p429 = pneg %p66
        $region66: #{tpu_custom_call.1} parent=63 // pred_check_branch
          %431 = sbr.rel (%p429) target = $region68
        $region67: #{tpu_custom_call.1} parent=63 // pred_region
          %433 = dma.done %s425, 2048
        $region68: #{tpu_custom_call.1} parent=63 // pred_fallthru
          _
        %s434 = sand.u32 %s31, 1
        %s435 = scalar_lea.sflag [#allocation6], %s434
        %s436 = sand.u32 %s81, 1
        %s437 = smul.addr %s436, 32
        %s438 = scalar_lea.vmem [#allocation5], %s437
        // Predicated region
        $region69: #{tpu_custom_call.1} parent=63 // pred_check
          %p439 = pneg %p94
        $region70: #{tpu_custom_call.1} parent=63 // pred_check_branch
          %441 = sbr.rel (%p439) target = $region72
        $region71: #{tpu_custom_call.1} parent=63 // pred_region
          %443 = dma.done %s435, 512
        $region72: #{tpu_custom_call.1} parent=63 // pred_fallthru
          _
        // Predicated region
        $region73: #{tpu_custom_call.1} parent=63 // pred_check
          %p444 = pneg %p136
        $region74: #{tpu_custom_call.1} parent=63 // pred_check_branch
          %446 = sbr.rel (%p444) target = $region76
        $region75: #{tpu_custom_call.1} parent=63 // pred_region
          %448 = dma.done [#allocation6], 2304
        $region76: #{tpu_custom_call.1} parent=63 // pred_fallthru
          _
        %s449 = sand.u32 %s53, 1
        %s450 = scalar_lea.sflag [#allocation3], %s449
        %s451 = sand.u32 %s53, 1
        %s452 = smul.addr %s451, 128
        %s453 = scalar_lea.vmem [#allocation2], %s452
        %p454 = pneg %p66
        %p455 = pneg %p63
        %s456 = sand.u32 %s31, 1
        %s457 = scalar_lea.sflag [#allocation6], %s456
        %s458 = sand.u32 %s81, 1
        %s459 = smul.addr %s458, 32
        %s460 = scalar_lea.vmem [#allocation5], %s459
        %p461 = pneg %p94
        %p462 = pneg %p91
        %p463 = pneg %p115
        %p464 = pneg %p112
        %p465 = pneg %p136
        %p466 = pneg %p133
        %p467 = pneg %p157
        %p468 = pneg %p154
        %p469 = pneg %p178
        %p470 = pneg %p175
        %p471 = pneg %p199
        %p472 = pneg %p196
        %p473 = pneg %p220
        %p474 = pneg %p217
        %p475 = pneg %p241
        %p476 = pneg %p238
        %p477 = pneg %p262
        %p478 = pneg %p259
        %p479 = pneg %p283
        %p480 = pneg %p280
        %p481 = pneg %p311
        %p482 = pneg %p308
        %s483 = sand.u32 %s298, 1
        %s484 = scalar_lea.sflag [#allocation4], %s483
        %s485 = sand.u32 %s298, 1
        %s486 = smul.addr %s485, 128
        %s487 = scalar_lea.vmem [#allocation8], %s486
        %s488 = smul.u32 8, %s36
        %s489 = smul.u32 8, %s36
        %v491 = vld [vmem:[%s438] sm:$0xff]
        %v492 = vld [vmem:[%s438 + $0x8] sm:$0xff]
        %s493 = scalar_lea.vmem %s438, 16 [#allocation5]
        %v494 = vld [vmem:[%s493] sm:$0xff]
        %v495 = vld [vmem:[%s493 + $0x8] sm:$0xff]
        %v496 = vld [vmem:[%s428] sm:$0xff]
        %v497 = vld [vmem:[%s428 + $0x8] sm:$0xff]
        %v498 = vld [vmem:[%s428 + $0x10] sm:$0xff]
        %v499 = vld [vmem:[%s428 + $0x18] sm:$0xff]
        %v500 = vld [vmem:[%s428 + $0x20] sm:$0xff]
        %v501 = vld [vmem:[%s428 + $0x28] sm:$0xff]
        %v502 = vld [vmem:[%s428 + $0x30] sm:$0xff]
        %v503 = vld [vmem:[%s428 + $0x38] sm:$0xff]
        %v504 = vld [vmem:[%s428 + $0x40] sm:$0xff]
        %v505 = vld [vmem:[%s428 + $0x48] sm:$0xff]
        %v506 = vld [vmem:[%s428 + $0x50] sm:$0xff]
        %v507 = vld [vmem:[%s428 + $0x58] sm:$0xff]
        %v508 = vld [vmem:[%s428 + $0x60] sm:$0xff]
        %v509 = vld [vmem:[%s428 + $0x68] sm:$0xff]
        %v510 = vld [vmem:[%s428 + $0x70] sm:$0xff]
        %v511 = vld [vmem:[%s428 + $0x78] sm:$0xff]
        %v512 = vpack.c.bf16 %v492, %v491
        %v513 = vpack.c.bf16 %v497, %v496
        %v514 = vpack.c.bf16 %v499, %v498
        %v515 = vpack.c.bf16 %v501, %v500
        %v516 = vpack.c.bf16 %v503, %v502
        %v517 = vpack.c.bf16 %v505, %v504
        %v518 = vpack.c.bf16 %v507, %v506
        %v519 = vpack.c.bf16 %v509, %v508
        %v520 = vpack.c.bf16 %v511, %v510
        %v521 = vpack.c.bf16 %v495, %v494
        %v522 = vld [vmem:[%s2] sm:$0xf]
        %v523 = vld [vmem:[%s2 + $0x4] sm:$0xf]
        %v524 = vld [vmem:[%s2 + $0x8] sm:$0xf]
        %v525 = vld [vmem:[%s2 + $0xc] sm:$0xf]
        %v526 = vld [vmem:[%s2 + $0x10] sm:$0xf]
        %v527 = vld [vmem:[%s2 + $0x14] sm:$0xf]
        %v528 = vld [vmem:[%s2 + $0x18] sm:$0xf]
        %v529 = vld [vmem:[%s2 + $0x1c] sm:$0xf]
        %v530 = vld [vmem:[%s2 + $0x20] sm:$0xf]
        %v531 = vld [vmem:[%s2 + $0x24] sm:$0xf]
        %v532 = vld [vmem:[%s2 + $0x28] sm:$0xf]
        %v533 = vld [vmem:[%s2 + $0x2c] sm:$0xf]
        %v534 = vld [vmem:[%s2 + $0x30] sm:$0xf]
        %v535 = vld [vmem:[%s2 + $0x34] sm:$0xf]
        %v536 = vld [vmem:[%s2 + $0x38] sm:$0xf]
        %v537 = vld [vmem:[%s2 + $0x3c] sm:$0xf]
        %v554 = vunpack.c.l.b16 %v522
        %v555 = vunpack.c.l.b16 %v523
        %v556 = vunpack.c.l.b16 %v524
        %v557 = vunpack.c.l.b16 %v525
        %v558 = vunpack.c.l.b16 %v526
        %v559 = vunpack.c.l.b16 %v527
        %v560 = vunpack.c.l.b16 %v528
        %v561 = vunpack.c.l.b16 %v529
        %v562 = vunpack.c.l.b16 %v530
        %v563 = vunpack.c.l.b16 %v531
        %v564 = vunpack.c.l.b16 %v532
        %v565 = vunpack.c.l.b16 %v533
        %v566 = vunpack.c.l.b16 %v534
        %v567 = vunpack.c.l.b16 %v535
        %v568 = vunpack.c.l.b16 %v536
        %v569 = vunpack.c.l.b16 %v537
        %v570 = vpack.c.b16 %v555, %v554
        %v571 = vpack.c.b16 %v557, %v556
        %v572 = vpack.c.b16 %v559, %v558
        %v573 = vpack.c.b16 %v561, %v560
        %v574 = vpack.c.b16 %v563, %v562
        %v575 = vpack.c.b16 %v565, %v564
        %v576 = vpack.c.b16 %v567, %v566
        %v577 = vpack.c.b16 %v569, %v568
        %586 = vmatpush.bf16.msra.mxu0 %v577
        %587 = vmatpush.bf16.msra.mxu0 %v576
        %588 = vmatpush.bf16.msra.mxu0 %v575
        %589 = vmatpush.bf16.msra.mxu0 %v574
        %590 = vmatpush.bf16.msra.mxu0 %v573
        %591 = vmatpush.bf16.msra.mxu0 %v572
        %592 = vmatpush.bf16.msra.mxu0 %v571
        %593 = vmatpush.bf16.msra.mxu0 %v570
        %594 = vmatmul.bf16.gmra.mxu0 %v512
        %v595 = vpop.f32.mrf.mxu0
        %v596 = vadd.f32 0.0, %v595
        %v597 = vpop.f32.mrf.mxu0
        %v598 = vadd.f32 0.0, %v597
        %599 = vmatmul.bf16.gmra.mxu0 %v513
        %v600 = vpop.f32.mrf.mxu0
        %v601 = vadd.f32 0.0, %v600
        %v602 = vpop.f32.mrf.mxu0
        %v603 = vadd.f32 0.0, %v602
        %604 = vmatmul.bf16.gmra.mxu0 %v514
        %v605 = vpop.f32.mrf.mxu0
        %v606 = vadd.f32 0.0, %v605
        %v607 = vpop.f32.mrf.mxu0
        %v608 = vadd.f32 0.0, %v607
        %609 = vmatmul.bf16.gmra.mxu0 %v515
        %v610 = vpop.f32.mrf.mxu0
        %v611 = vadd.f32 0.0, %v610
        %v612 = vpop.f32.mrf.mxu0
        %v613 = vadd.f32 0.0, %v612
        %614 = vmatmul.bf16.gmra.mxu0 %v516
        %v615 = vpop.f32.mrf.mxu0
        %v616 = vadd.f32 0.0, %v615
        %v617 = vpop.f32.mrf.mxu0
        %v618 = vadd.f32 0.0, %v617
        %619 = vmatmul.bf16.gmra.mxu0 %v517
        %v620 = vpop.f32.mrf.mxu0
        %v621 = vadd.f32 0.0, %v620
        %v622 = vpop.f32.mrf.mxu0
        %v623 = vadd.f32 0.0, %v622
        %624 = vmatmul.bf16.gmra.mxu0 %v518
        %v625 = vpop.f32.mrf.mxu0
        %v626 = vadd.f32 0.0, %v625
        %v627 = vpop.f32.mrf.mxu0
        %v628 = vadd.f32 0.0, %v627
        %629 = vmatmul.bf16.gmra.mxu0 %v519
        %v630 = vpop.f32.mrf.mxu0
        %v631 = vadd.f32 0.0, %v630
        %v632 = vpop.f32.mrf.mxu0
        %v633 = vadd.f32 0.0, %v632
        %634 = vmatmul.bf16.gmra.mxu0 %v520
        %v635 = vpop.f32.mrf.mxu0
        %v636 = vadd.f32 0.0, %v635
        %v637 = vpop.f32.mrf.mxu0
        %v638 = vadd.f32 0.0, %v637
        %639 = vmatmul.bf16.gmra.mxu0 %v521
        %v640 = vpop.f32.mrf.mxu0
        %v641 = vadd.f32 0.0, %v640
        %v642 = vpop.f32.mrf.mxu0
        %v643 = vadd.f32 0.0, %v642
        %644 = vdwg.mxu0
        %v645 = vld [vmem:[%s5] sm:$0x1]
        %v647 = vperm.slane %v645, 0
        %v649 = vmul.f32 %v596, %v647
        %v650 = vmul.f32 %v598, %v647
        %v651 = vmul.f32 %v601, %v647
        %v652 = vmul.f32 %v603, %v647
        %v653 = vmul.f32 %v606, %v647
        %v654 = vmul.f32 %v608, %v647
        %v655 = vmul.f32 %v611, %v647
        %v656 = vmul.f32 %v613, %v647
        %v657 = vmul.f32 %v616, %v647
        %v658 = vmul.f32 %v618, %v647
        %v659 = vmul.f32 %v621, %v647
        %v660 = vmul.f32 %v623, %v647
        %v661 = vmul.f32 %v626, %v647
        %v662 = vmul.f32 %v628, %v647
        %v663 = vmul.f32 %v631, %v647
        %v664 = vmul.f32 %v633, %v647
        %v665 = vmul.f32 %v636, %v647
        %v666 = vmul.f32 %v638, %v647
        %v667 = vmul.f32 %v641, %v647
        %v668 = vmul.f32 %v643, %v647
        %v669 = vld [vmem:[%s6] sm:$0x1]
        %v671 = vperm.slane %v669, 0
        %v673 = vadd.f32 %v649, %v671
        %v674 = vadd.f32 %v650, %v671
        %v675 = vadd.f32 %v651, %v671
        %v676 = vadd.f32 %v652, %v671
        %v677 = vadd.f32 %v653, %v671
        %v678 = vadd.f32 %v654, %v671
        %v679 = vadd.f32 %v655, %v671
        %v680 = vadd.f32 %v656, %v671
        %v681 = vadd.f32 %v657, %v671
        %v682 = vadd.f32 %v658, %v671
        %v683 = vadd.f32 %v659, %v671
        %v684 = vadd.f32 %v660, %v671
        %v685 = vadd.f32 %v661, %v671
        %v686 = vadd.f32 %v662, %v671
        %v687 = vadd.f32 %v663, %v671
        %v688 = vadd.f32 %v664, %v671
        %v689 = vadd.f32 %v665, %v671
        %v690 = vadd.f32 %v666, %v671
        %v691 = vadd.f32 %v667, %v671
        %v692 = vadd.f32 %v668, %v671
        %v693 = vmax.f32 %v673, 0.0
        %v694 = vmax.f32 %v674, 0.0
        %v695 = vmax.f32 %v675, 0.0
        %v696 = vmax.f32 %v676, 0.0
        %v697 = vmax.f32 %v677, 0.0
        %v698 = vmax.f32 %v678, 0.0
        %v699 = vmax.f32 %v679, 0.0
        %v700 = vmax.f32 %v680, 0.0
        %v701 = vmax.f32 %v681, 0.0
        %v702 = vmax.f32 %v682, 0.0
        %v703 = vmax.f32 %v683, 0.0
        %v704 = vmax.f32 %v684, 0.0
        %v705 = vmax.f32 %v685, 0.0
        %v706 = vmax.f32 %v686, 0.0
        %v707 = vmax.f32 %v687, 0.0
        %v708 = vmax.f32 %v688, 0.0
        %v709 = vmax.f32 %v689, 0.0
        %v710 = vmax.f32 %v690, 0.0
        %v711 = vmax.f32 %v691, 0.0
        %v712 = vmax.f32 %v692, 0.0
        %p713 = scmp.gt.s32.totalorder %s36, 0
        %p714 = scmp.lt.s32.totalorder %s36, 1
        %s715 = scalar_select %p713, 1, 0
        %v716 = vstv %s715
        %vm717 = vcmp.eq.s32.totalorder %v716, 1
        %s718 = scalar_select %p714, 1, 0
        %v719 = vstv %s718
        %vm720 = vcmp.eq.s32.totalorder %v719, 1
        %v721 = vsel %vm717, %v693, 0.0
        %v722 = vsel %vm717, %v694, 0.0
        %v723 = vsel 1, %v695, 0.0
        %v724 = vsel 1, %v696, 0.0
        %v725 = vsel 1, %v697, 0.0
        %v726 = vsel 1, %v698, 0.0
        %v727 = vsel 1, %v699, 0.0
        %v728 = vsel 1, %v700, 0.0
        %v729 = vsel 1, %v701, 0.0
        %v730 = vsel 1, %v702, 0.0
        %v731 = vsel 1, %v703, 0.0
        %v732 = vsel 1, %v704, 0.0
        %v733 = vsel 1, %v705, 0.0
        %v734 = vsel 1, %v706, 0.0
        %v735 = vsel 1, %v707, 0.0
        %v736 = vsel 1, %v708, 0.0
        %v737 = vsel 1, %v709, 0.0
        %v738 = vsel 1, %v710, 0.0
        %v739 = vsel %vm720, %v711, 0.0
        %v740 = vsel %vm720, %v712, 0.0
        %v741 = vlaneseq
        %v742 = vshrl.u32 %v741, 7
        %v743 = vadd.s32 %v742, 8
        %vm744 = vcmp.ge.s32.totalorder %v742, 1
        %vm745 = vcmp.ge.s32.totalorder %v743, 1
        %v746 = vrot.slane %v721, 7
        %v747 = vrot.slane %v723, 7
        %v748 = vrot.slane %v725, 7
        %v749 = vrot.slane %v727, 7
        %v750 = vrot.slane %v729, 7
        %v751 = vrot.slane %v731, 7
        %v752 = vrot.slane %v733, 7
        %v753 = vrot.slane %v735, 7
        %v754 = vrot.slane %v737, 7
        %v755 = vrot.slane %v739, 7
        %v756 = vrot.slane %v722, 7
        %v757 = vrot.slane %v724, 7
        %v758 = vrot.slane %v726, 7
        %v759 = vrot.slane %v728, 7
        %v760 = vrot.slane %v730, 7
        %v761 = vrot.slane %v732, 7
        %v762 = vrot.slane %v734, 7
        %v763 = vrot.slane %v736, 7
        %v764 = vrot.slane %v738, 7
        %v765 = vrot.slane %v740, 7
        %vm766 = vcmp.lt.s32.totalorder %v742, 1
        %v767 = vsel %vm766, %v746, %v756
        %v768 = vsel %vm766, %v747, %v757
        %v769 = vsel %vm766, %v748, %v758
        %v770 = vsel %vm766, %v749, %v759
        %v771 = vsel %vm766, %v750, %v760
        %v772 = vsel %vm766, %v751, %v761
        %v773 = vsel %vm766, %v752, %v762
        %v774 = vsel %vm766, %v753, %v763
        %v775 = vsel %vm766, %v754, %v764
        %v776 = vsel %vm766, %v755, %v765
        %v777 = vsel %vm766, %v756, %v746
        %v778 = vsel %vm766, %v757, %v747
        %v779 = vsel %vm766, %v758, %v748
        %v780 = vsel %vm766, %v759, %v749
        %v781 = vsel %vm766, %v760, %v750
        %v782 = vsel %vm766, %v761, %v751
        %v783 = vsel %vm766, %v762, %v752
        %v784 = vsel %vm766, %v763, %v753
        %v785 = vsel %vm766, %v764, %v754
        %v786 = vsel %vm766, %v765, %v755
        %v787 = vsel %vm744, %v777, 0.0
        %v788 = vsel %vm745, %v767, 0.0
        %v789 = vsel %vm744, %v778, 0.0
        %v790 = vsel %vm745, %v768, 0.0
        %v791 = vsel %vm744, %v779, 0.0
        %v792 = vsel %vm745, %v769, 0.0
        %v793 = vsel %vm744, %v780, 0.0
        %v794 = vsel %vm745, %v770, 0.0
        %v795 = vsel %vm744, %v781, 0.0
        %v796 = vsel %vm745, %v771, 0.0
        %v797 = vsel %vm744, %v782, 0.0
        %v798 = vsel %vm745, %v772, 0.0
        %v799 = vsel %vm744, %v783, 0.0
        %v800 = vsel %vm745, %v773, 0.0
        %v801 = vsel %vm744, %v784, 0.0
        %v802 = vsel %vm745, %v774, 0.0
        %v803 = vsel %vm744, %v785, 0.0
        %v804 = vsel %vm745, %v775, 0.0
        %v805 = vsel %vm744, %v786, 0.0
        %v806 = vsel %vm745, %v776, 0.0
        %vm807 = vcmp.lt.s32.totalorder %v742, 15
        %vm808 = vcmp.lt.s32.totalorder %v743, 15
        %v809 = vrot.slane %v721, 1
        %v810 = vrot.slane %v723, 1
        %v811 = vrot.slane %v725, 1
        %v812 = vrot.slane %v727, 1
        %v813 = vrot.slane %v729, 1
        %v814 = vrot.slane %v731, 1
        %v815 = vrot.slane %v733, 1
        %v816 = vrot.slane %v735, 1
        %v817 = vrot.slane %v737, 1
        %v818 = vrot.slane %v739, 1
        %v819 = vrot.slane %v722, 1
        %v820 = vrot.slane %v724, 1
        %v821 = vrot.slane %v726, 1
        %v822 = vrot.slane %v728, 1
        %v823 = vrot.slane %v730, 1
        %v824 = vrot.slane %v732, 1
        %v825 = vrot.slane %v734, 1
        %v826 = vrot.slane %v736, 1
        %v827 = vrot.slane %v738, 1
        %v828 = vrot.slane %v740, 1
        %vm829 = vcmp.lt.s32.totalorder %v742, 7
        %v830 = vsel %vm829, %v809, %v819
        %v831 = vsel %vm829, %v810, %v820
        %v832 = vsel %vm829, %v811, %v821
        %v833 = vsel %vm829, %v812, %v822
        %v834 = vsel %vm829, %v813, %v823
        %v835 = vsel %vm829, %v814, %v824
        %v836 = vsel %vm829, %v815, %v825
        %v837 = vsel %vm829, %v816, %v826
        %v838 = vsel %vm829, %v817, %v827
        %v839 = vsel %vm829, %v818, %v828
        %v840 = vsel %vm829, %v819, %v809
        %v841 = vsel %vm829, %v820, %v810
        %v842 = vsel %vm829, %v821, %v811
        %v843 = vsel %vm829, %v822, %v812
        %v844 = vsel %vm829, %v823, %v813
        %v845 = vsel %vm829, %v824, %v814
        %v846 = vsel %vm829, %v825, %v815
        %v847 = vsel %vm829, %v826, %v816
        %v848 = vsel %vm829, %v827, %v817
        %v849 = vsel %vm829, %v828, %v818
        %v850 = vsel %vm807, %v830, 0.0
        %v851 = vsel %vm808, %v840, 0.0
        %v852 = vsel %vm807, %v831, 0.0
        %v853 = vsel %vm808, %v841, 0.0
        %v854 = vsel %vm807, %v832, 0.0
        %v855 = vsel %vm808, %v842, 0.0
        %v856 = vsel %vm807, %v833, 0.0
        %v857 = vsel %vm808, %v843, 0.0
        %v858 = vsel %vm807, %v834, 0.0
        %v859 = vsel %vm808, %v844, 0.0
        %v860 = vsel %vm807, %v835, 0.0
        %v861 = vsel %vm808, %v845, 0.0
        %v862 = vsel %vm807, %v836, 0.0
        %v863 = vsel %vm808, %v846, 0.0
        %v864 = vsel %vm807, %v837, 0.0
        %v865 = vsel %vm808, %v847, 0.0
        %v866 = vsel %vm807, %v838, 0.0
        %v867 = vsel %vm808, %v848, 0.0
        %v868 = vsel %vm807, %v839, 0.0
        %v869 = vsel %vm808, %v849, 0.0
        %v870 = vpack.c.bf16 %v788, %v787
        %v871 = vpack.c.bf16 %v790, %v789
        %v872 = vpack.c.bf16 %v792, %v791
        %v873 = vpack.c.bf16 %v794, %v793
        %v874 = vpack.c.bf16 %v796, %v795
        %v875 = vpack.c.bf16 %v798, %v797
        %v876 = vpack.c.bf16 %v800, %v799
        %v877 = vpack.c.bf16 %v802, %v801
        %v878 = vld [vmem:[#allocation7] sm:$0xf]
        %v879 = vld [vmem:[#allocation7 + $0x4] sm:$0xf]
        %v880 = vld [vmem:[#allocation7 + $0x8] sm:$0xf]
        %v881 = vld [vmem:[#allocation7 + $0xc] sm:$0xf]
        %v882 = vpack.c.bf16 %v722, %v721
        %v883 = vpack.c.bf16 %v724, %v723
        %v884 = vpack.c.bf16 %v726, %v725
        %v885 = vpack.c.bf16 %v728, %v727
        %v886 = vpack.c.bf16 %v730, %v729
        %v887 = vpack.c.bf16 %v732, %v731
        %v888 = vpack.c.bf16 %v734, %v733
        %v889 = vpack.c.bf16 %v736, %v735
        %s890 = scalar_lea.vmem [#allocation7], 16
        %v891 = vld [vmem:[%s890] sm:$0xf]
        %v892 = vld [vmem:[%s890 + $0x4] sm:$0xf]
        %v893 = vld [vmem:[%s890 + $0x8] sm:$0xf]
        %v894 = vld [vmem:[%s890 + $0xc] sm:$0xf]
        %v899 = vunpack.c.l.b16 %v891
        %v900 = vunpack.c.l.b16 %v892
        %v901 = vunpack.c.l.b16 %v893
        %v902 = vunpack.c.l.b16 %v894
        %v903 = vpack.c.b16 %v900, %v899
        %v904 = vpack.c.b16 %v902, %v901
        %vm907 = vcmask 261120
        %v909 = vsel %vm907, %v882, 0
        %v912 = vsel %vm907, %v883, 0
        %v915 = vsel %vm907, %v884, 0
        %v918 = vsel %vm907, %v885, 0
        %v921 = vsel %vm907, %v886, 0
        %v924 = vsel %vm907, %v887, 0
        %v927 = vsel %vm907, %v888, 0
        %v930 = vsel %vm907, %v889, 0
        %932 = vmatpush.bf16.msra.mxu0 0
        %933 = vmatpush.bf16.msra.mxu0 0
        %934 = vmatpush.bf16.msra.mxu0 0
        %935 = vmatpush.bf16.msra.mxu0 0
        %936 = vmatpush.bf16.msra.mxu0 0
        %937 = vmatpush.bf16.msra.mxu0 0
        %938 = vmatpush.bf16.msra.mxu0 %v904
        %939 = vmatpush.bf16.msra.mxu0 %v903
        %940 = vmatmul.bf16.gmra.mxu0 %v909
        %v941 = vpop.f32.mrf.mxu0
        %v942 = vadd.f32 0.0, %v941
        %v943 = vpop.f32.mrf.mxu0
        %v944 = vadd.f32 0.0, %v943
        %945 = vmatmul.bf16.gmra.mxu0 %v912
        %v946 = vpop.f32.mrf.mxu0
        %v947 = vadd.f32 0.0, %v946
        %v948 = vpop.f32.mrf.mxu0
        %v949 = vadd.f32 0.0, %v948
        %950 = vmatmul.bf16.gmra.mxu0 %v915
        %v951 = vpop.f32.mrf.mxu0
        %v952 = vadd.f32 0.0, %v951
        %v953 = vpop.f32.mrf.mxu0
        %v954 = vadd.f32 0.0, %v953
        %955 = vmatmul.bf16.gmra.mxu0 %v918
        %v956 = vpop.f32.mrf.mxu0
        %v957 = vadd.f32 0.0, %v956
        %v958 = vpop.f32.mrf.mxu0
        %v959 = vadd.f32 0.0, %v958
        %960 = vmatmul.bf16.gmra.mxu0 %v921
        %v961 = vpop.f32.mrf.mxu0
        %v962 = vadd.f32 0.0, %v961
        %v963 = vpop.f32.mrf.mxu0
        %v964 = vadd.f32 0.0, %v963
        %965 = vmatmul.bf16.gmra.mxu0 %v924
        %v966 = vpop.f32.mrf.mxu0
        %v967 = vadd.f32 0.0, %v966
        %v968 = vpop.f32.mrf.mxu0
        %v969 = vadd.f32 0.0, %v968
        %970 = vmatmul.bf16.gmra.mxu0 %v927
        %v971 = vpop.f32.mrf.mxu0
        %v972 = vadd.f32 0.0, %v971
        %v973 = vpop.f32.mrf.mxu0
        %v974 = vadd.f32 0.0, %v973
        %975 = vmatmul.bf16.gmra.mxu0 %v930
        %v976 = vpop.f32.mrf.mxu0
        %v977 = vadd.f32 0.0, %v976
        %v978 = vpop.f32.mrf.mxu0
        %v979 = vadd.f32 0.0, %v978
        %980 = vdwg.mxu0
        %v985 = vunpack.c.l.b16 %v878
        %v986 = vunpack.c.l.b16 %v879
        %v987 = vunpack.c.l.b16 %v880
        %v988 = vunpack.c.l.b16 %v881
        %v989 = vpack.c.b16 %v986, %v985
        %v990 = vpack.c.b16 %v988, %v987
        %v994 = vsel %vm907, %v870, 0
        %v997 = vsel %vm907, %v871, 0
        %v1000 = vsel %vm907, %v872, 0
        %v1003 = vsel %vm907, %v873, 0
        %v1006 = vsel %vm907, %v874, 0
        %v1009 = vsel %vm907, %v875, 0
        %v1012 = vsel %vm907, %v876, 0
        %v1015 = vsel %vm907, %v877, 0
        %1017 = vmatpush.bf16.msra.mxu0 0
        %1018 = vmatpush.bf16.msra.mxu0 0
        %1019 = vmatpush.bf16.msra.mxu0 0
        %1020 = vmatpush.bf16.msra.mxu0 0
        %1021 = vmatpush.bf16.msra.mxu0 0
        %1022 = vmatpush.bf16.msra.mxu0 0
        %1023 = vmatpush.bf16.msra.mxu0 %v990
        %1024 = vmatpush.bf16.msra.mxu0 %v989
        %1025 = vmatmul.bf16.gmra.mxu0 %v994
        %v1026 = vpop.f32.mrf.mxu0
        %v1027 = vadd.f32 %v942, %v1026
        %v1028 = vpop.f32.mrf.mxu0
        %v1029 = vadd.f32 %v944, %v1028
        %1030 = vmatmul.bf16.gmra.mxu0 %v997
        %v1031 = vpop.f32.mrf.mxu0
        %v1032 = vadd.f32 %v947, %v1031
        %v1033 = vpop.f32.mrf.mxu0
        %v1034 = vadd.f32 %v949, %v1033
        %1035 = vmatmul.bf16.gmra.mxu0 %v1000
        %v1036 = vpop.f32.mrf.mxu0
        %v1037 = vadd.f32 %v952, %v1036
        %v1038 = vpop.f32.mrf.mxu0
        %v1039 = vadd.f32 %v954, %v1038
        %1040 = vmatmul.bf16.gmra.mxu0 %v1003
        %v1041 = vpop.f32.mrf.mxu0
        %v1042 = vadd.f32 %v957, %v1041
        %v1043 = vpop.f32.mrf.mxu0
        %v1044 = vadd.f32 %v959, %v1043
        %1045 = vmatmul.bf16.gmra.mxu0 %v1006
        %v1046 = vpop.f32.mrf.mxu0
        %v1047 = vadd.f32 %v962, %v1046
        %v1048 = vpop.f32.mrf.mxu0
        %v1049 = vadd.f32 %v964, %v1048
        %1050 = vmatmul.bf16.gmra.mxu0 %v1009
        %v1051 = vpop.f32.mrf.mxu0
        %v1052 = vadd.f32 %v967, %v1051
        %v1053 = vpop.f32.mrf.mxu0
        %v1054 = vadd.f32 %v969, %v1053
        %1055 = vmatmul.bf16.gmra.mxu0 %v1012
        %v1056 = vpop.f32.mrf.mxu0
        %v1057 = vadd.f32 %v972, %v1056
        %v1058 = vpop.f32.mrf.mxu0
        %v1059 = vadd.f32 %v974, %v1058
        %1060 = vmatmul.bf16.gmra.mxu0 %v1015
        %v1061 = vpop.f32.mrf.mxu0
        %v1062 = vadd.f32 %v977, %v1061
        %v1063 = vpop.f32.mrf.mxu0
        %v1064 = vadd.f32 %v979, %v1063
        %1065 = vdwg.mxu0
        %v1066 = vpack.c.bf16 %v851, %v850
        %v1067 = vpack.c.bf16 %v853, %v852
        %v1068 = vpack.c.bf16 %v855, %v854
        %v1069 = vpack.c.bf16 %v857, %v856
        %v1070 = vpack.c.bf16 %v859, %v858
        %v1071 = vpack.c.bf16 %v861, %v860
        %v1072 = vpack.c.bf16 %v863, %v862
        %v1073 = vpack.c.bf16 %v865, %v864
        %s1074 = scalar_lea.vmem [#allocation7], 32
        %v1075 = vld [vmem:[%s1074] sm:$0xf]
        %v1076 = vld [vmem:[%s1074 + $0x4] sm:$0xf]
        %v1077 = vld [vmem:[%s1074 + $0x8] sm:$0xf]
        %v1078 = vld [vmem:[%s1074 + $0xc] sm:$0xf]
        %v1083 = vunpack.c.l.b16 %v1075
        %v1084 = vunpack.c.l.b16 %v1076
        %v1085 = vunpack.c.l.b16 %v1077
        %v1086 = vunpack.c.l.b16 %v1078
        %v1087 = vpack.c.b16 %v1084, %v1083
        %v1088 = vpack.c.b16 %v1086, %v1085
        %v1092 = vsel %vm907, %v1066, 0
        %v1095 = vsel %vm907, %v1067, 0
        %v1098 = vsel %vm907, %v1068, 0
        %v1101 = vsel %vm907, %v1069, 0
        %v1104 = vsel %vm907, %v1070, 0
        %v1107 = vsel %vm907, %v1071, 0
        %v1110 = vsel %vm907, %v1072, 0
        %v1113 = vsel %vm907, %v1073, 0
        %1115 = vmatpush.bf16.msra.mxu0 0
        %1116 = vmatpush.bf16.msra.mxu0 0
        %1117 = vmatpush.bf16.msra.mxu0 0
        %1118 = vmatpush.bf16.msra.mxu0 0
        %1119 = vmatpush.bf16.msra.mxu0 0
        %1120 = vmatpush.bf16.msra.mxu0 0
        %1121 = vmatpush.bf16.msra.mxu0 %v1088
        %1122 = vmatpush.bf16.msra.mxu0 %v1087
        %1123 = vmatmul.bf16.gmra.mxu0 %v1092
        %v1124 = vpop.f32.mrf.mxu0
        %v1125 = vadd.f32 0.0, %v1124
        %v1126 = vpop.f32.mrf.mxu0
        %v1127 = vadd.f32 0.0, %v1126
        %1128 = vmatmul.bf16.gmra.mxu0 %v1095
        %v1129 = vpop.f32.mrf.mxu0
        %v1130 = vadd.f32 0.0, %v1129
        %v1131 = vpop.f32.mrf.mxu0
        %v1132 = vadd.f32 0.0, %v1131
        %1133 = vmatmul.bf16.gmra.mxu0 %v1098
        %v1134 = vpop.f32.mrf.mxu0
        %v1135 = vadd.f32 0.0, %v1134
        %v1136 = vpop.f32.mrf.mxu0
        %v1137 = vadd.f32 0.0, %v1136
        %1138 = vmatmul.bf16.gmra.mxu0 %v1101
        %v1139 = vpop.f32.mrf.mxu0
        %v1140 = vadd.f32 0.0, %v1139
        %v1141 = vpop.f32.mrf.mxu0
        %v1142 = vadd.f32 0.0, %v1141
        %1143 = vmatmul.bf16.gmra.mxu0 %v1104
        %v1144 = vpop.f32.mrf.mxu0
        %v1145 = vadd.f32 0.0, %v1144
        %v1146 = vpop.f32.mrf.mxu0
        %v1147 = vadd.f32 0.0, %v1146
        %1148 = vmatmul.bf16.gmra.mxu0 %v1107
        %v1149 = vpop.f32.mrf.mxu0
        %v1150 = vadd.f32 0.0, %v1149
        %v1151 = vpop.f32.mrf.mxu0
        %v1152 = vadd.f32 0.0, %v1151
        %1153 = vmatmul.bf16.gmra.mxu0 %v1110
        %v1154 = vpop.f32.mrf.mxu0
        %v1155 = vadd.f32 0.0, %v1154
        %v1156 = vpop.f32.mrf.mxu0
        %v1157 = vadd.f32 0.0, %v1156
        %1158 = vmatmul.bf16.gmra.mxu0 %v1113
        %v1159 = vpop.f32.mrf.mxu0
        %v1160 = vadd.f32 0.0, %v1159
        %v1161 = vpop.f32.mrf.mxu0
        %v1162 = vadd.f32 0.0, %v1161
        %1163 = vdwg.mxu0
        %v1164 = vadd.f32 %v1027, %v1125
        %v1165 = vadd.f32 %v1029, %v1127
        %v1166 = vadd.f32 %v1032, %v1130
        %v1167 = vadd.f32 %v1034, %v1132
        %v1168 = vadd.f32 %v1037, %v1135
        %v1169 = vadd.f32 %v1039, %v1137
        %v1170 = vadd.f32 %v1042, %v1140
        %v1171 = vadd.f32 %v1044, %v1142
        %v1172 = vadd.f32 %v1047, %v1145
        %v1173 = vadd.f32 %v1049, %v1147
        %v1174 = vadd.f32 %v1052, %v1150
        %v1175 = vadd.f32 %v1054, %v1152
        %v1176 = vadd.f32 %v1057, %v1155
        %v1177 = vadd.f32 %v1059, %v1157
        %v1178 = vadd.f32 %v1062, %v1160
        %v1179 = vadd.f32 %v1064, %v1162
        %v1180 = vpack.c.bf16 %v804, %v803
        %s1181 = scalar_lea.vmem [#allocation7], 48
        %v1182 = vld [vmem:[%s1181] sm:$0xf]
        %v1183 = vld [vmem:[%s1181 + $0x4] sm:$0xf]
        %v1184 = vld [vmem:[%s1181 + $0x8] sm:$0xf]
        %v1185 = vld [vmem:[%s1181 + $0xc] sm:$0xf]
        %v1190 = vunpack.c.l.b16 %v1182
        %v1191 = vunpack.c.l.b16 %v1183
        %v1192 = vunpack.c.l.b16 %v1184
        %v1193 = vunpack.c.l.b16 %v1185
        %v1194 = vpack.c.b16 %v1191, %v1190
        %v1195 = vpack.c.b16 %v1193, %v1192
        %v1199 = vsel %vm907, %v1180, 0
        %1201 = vmatpush.bf16.msra.mxu0 0
        %1202 = vmatpush.bf16.msra.mxu0 0
        %1203 = vmatpush.bf16.msra.mxu0 0
        %1204 = vmatpush.bf16.msra.mxu0 0
        %1205 = vmatpush.bf16.msra.mxu0 0
        %1206 = vmatpush.bf16.msra.mxu0 0
        %1207 = vmatpush.bf16.msra.mxu0 %v1195
        %1208 = vmatpush.bf16.msra.mxu0 %v1194
        %1209 = vmatmul.bf16.gmra.mxu0 %v997
        %v1210 = vpop.f32.mrf.mxu0
        %v1211 = vadd.f32 0.0, %v1210
        %v1212 = vpop.f32.mrf.mxu0
        %v1213 = vadd.f32 0.0, %v1212
        %1214 = vmatmul.bf16.gmra.mxu0 %v1000
        %v1215 = vpop.f32.mrf.mxu0
        %v1216 = vadd.f32 0.0, %v1215
        %v1217 = vpop.f32.mrf.mxu0
        %v1218 = vadd.f32 0.0, %v1217
        %1219 = vmatmul.bf16.gmra.mxu0 %v1003
        %v1220 = vpop.f32.mrf.mxu0
        %v1221 = vadd.f32 0.0, %v1220
        %v1222 = vpop.f32.mrf.mxu0
        %v1223 = vadd.f32 0.0, %v1222
        %1224 = vmatmul.bf16.gmra.mxu0 %v1006
        %v1225 = vpop.f32.mrf.mxu0
        %v1226 = vadd.f32 0.0, %v1225
        %v1227 = vpop.f32.mrf.mxu0
        %v1228 = vadd.f32 0.0, %v1227
        %1229 = vmatmul.bf16.gmra.mxu0 %v1009
        %v1230 = vpop.f32.mrf.mxu0
        %v1231 = vadd.f32 0.0, %v1230
        %v1232 = vpop.f32.mrf.mxu0
        %v1233 = vadd.f32 0.0, %v1232
        %1234 = vmatmul.bf16.gmra.mxu0 %v1012
        %v1235 = vpop.f32.mrf.mxu0
        %v1236 = vadd.f32 0.0, %v1235
        %v1237 = vpop.f32.mrf.mxu0
        %v1238 = vadd.f32 0.0, %v1237
        %1239 = vmatmul.bf16.gmra.mxu0 %v1015
        %v1240 = vpop.f32.mrf.mxu0
        %v1241 = vadd.f32 0.0, %v1240
        %v1242 = vpop.f32.mrf.mxu0
        %v1243 = vadd.f32 0.0, %v1242
        %1244 = vmatmul.bf16.gmra.mxu0 %v1199
        %v1245 = vpop.f32.mrf.mxu0
        %v1246 = vadd.f32 0.0, %v1245
        %v1247 = vpop.f32.mrf.mxu0
        %v1248 = vadd.f32 0.0, %v1247
        %1249 = vdwg.mxu0
        %v1250 = vadd.f32 %v1164, %v1211
        %v1251 = vadd.f32 %v1165, %v1213
        %v1252 = vadd.f32 %v1166, %v1216
        %v1253 = vadd.f32 %v1167, %v1218
        %v1254 = vadd.f32 %v1168, %v1221
        %v1255 = vadd.f32 %v1169, %v1223
        %v1256 = vadd.f32 %v1170, %v1226
        %v1257 = vadd.f32 %v1171, %v1228
        %v1258 = vadd.f32 %v1172, %v1231
        %v1259 = vadd.f32 %v1173, %v1233
        %v1260 = vadd.f32 %v1174, %v1236
        %v1261 = vadd.f32 %v1175, %v1238
        %v1262 = vadd.f32 %v1176, %v1241
        %v1263 = vadd.f32 %v1177, %v1243
        %v1264 = vadd.f32 %v1178, %v1246
        %v1265 = vadd.f32 %v1179, %v1248
        %v1266 = vpack.c.bf16 %v738, %v737
        %s1267 = scalar_lea.vmem [#allocation7], 64
        %v1268 = vld [vmem:[%s1267] sm:$0xf]
        %v1269 = vld [vmem:[%s1267 + $0x4] sm:$0xf]
        %v1270 = vld [vmem:[%s1267 + $0x8] sm:$0xf]
        %v1271 = vld [vmem:[%s1267 + $0xc] sm:$0xf]
        %v1276 = vunpack.c.l.b16 %v1268
        %v1277 = vunpack.c.l.b16 %v1269
        %v1278 = vunpack.c.l.b16 %v1270
        %v1279 = vunpack.c.l.b16 %v1271
        %v1280 = vpack.c.b16 %v1277, %v1276
        %v1281 = vpack.c.b16 %v1279, %v1278
        %v1285 = vsel %vm907, %v1266, 0
        %1287 = vmatpush.bf16.msra.mxu0 0
        %1288 = vmatpush.bf16.msra.mxu0 0
        %1289 = vmatpush.bf16.msra.mxu0 0
        %1290 = vmatpush.bf16.msra.mxu0 0
        %1291 = vmatpush.bf16.msra.mxu0 0
        %1292 = vmatpush.bf16.msra.mxu0 0
        %1293 = vmatpush.bf16.msra.mxu0 %v1281
        %1294 = vmatpush.bf16.msra.mxu0 %v1280
        %1295 = vmatmul.bf16.gmra.mxu0 %v912
        %v1296 = vpop.f32.mrf.mxu0
        %v1297 = vadd.f32 0.0, %v1296
        %v1298 = vpop.f32.mrf.mxu0
        %v1299 = vadd.f32 0.0, %v1298
        %1300 = vmatmul.bf16.gmra.mxu0 %v915
        %v1301 = vpop.f32.mrf.mxu0
        %v1302 = vadd.f32 0.0, %v1301
        %v1303 = vpop.f32.mrf.mxu0
        %v1304 = vadd.f32 0.0, %v1303
        %1305 = vmatmul.bf16.gmra.mxu0 %v918
        %v1306 = vpop.f32.mrf.mxu0
        %v1307 = vadd.f32 0.0, %v1306
        %v1308 = vpop.f32.mrf.mxu0
        %v1309 = vadd.f32 0.0, %v1308
        %1310 = vmatmul.bf16.gmra.mxu0 %v921
        %v1311 = vpop.f32.mrf.mxu0
        %v1312 = vadd.f32 0.0, %v1311
        %v1313 = vpop.f32.mrf.mxu0
        %v1314 = vadd.f32 0.0, %v1313
        %1315 = vmatmul.bf16.gmra.mxu0 %v924
        %v1316 = vpop.f32.mrf.mxu0
        %v1317 = vadd.f32 0.0, %v1316
        %v1318 = vpop.f32.mrf.mxu0
        %v1319 = vadd.f32 0.0, %v1318
        %1320 = vmatmul.bf16.gmra.mxu0 %v927
        %v1321 = vpop.f32.mrf.mxu0
        %v1322 = vadd.f32 0.0, %v1321
        %v1323 = vpop.f32.mrf.mxu0
        %v1324 = vadd.f32 0.0, %v1323
        %1325 = vmatmul.bf16.gmra.mxu0 %v930
        %v1326 = vpop.f32.mrf.mxu0
        %v1327 = vadd.f32 0.0, %v1326
        %v1328 = vpop.f32.mrf.mxu0
        %v1329 = vadd.f32 0.0, %v1328
        %1330 = vmatmul.bf16.gmra.mxu0 %v1285
        %v1331 = vpop.f32.mrf.mxu0
        %v1332 = vadd.f32 0.0, %v1331
        %v1333 = vpop.f32.mrf.mxu0
        %v1334 = vadd.f32 0.0, %v1333
        %1335 = vdwg.mxu0
        %v1336 = vadd.f32 %v1250, %v1297
        %v1337 = vadd.f32 %v1251, %v1299
        %v1338 = vadd.f32 %v1252, %v1302
        %v1339 = vadd.f32 %v1253, %v1304
        %v1340 = vadd.f32 %v1254, %v1307
        %v1341 = vadd.f32 %v1255, %v1309
        %v1342 = vadd.f32 %v1256, %v1312
        %v1343 = vadd.f32 %v1257, %v1314
        %v1344 = vadd.f32 %v1258, %v1317
        %v1345 = vadd.f32 %v1259, %v1319
        %v1346 = vadd.f32 %v1260, %v1322
        %v1347 = vadd.f32 %v1261, %v1324
        %v1348 = vadd.f32 %v1262, %v1327
        %v1349 = vadd.f32 %v1263, %v1329
        %v1350 = vadd.f32 %v1264, %v1332
        %v1351 = vadd.f32 %v1265, %v1334
        %v1352 = vpack.c.bf16 %v867, %v866
        %s1353 = scalar_lea.vmem [#allocation7], 80
        %v1354 = vld [vmem:[%s1353] sm:$0xf]
        %v1355 = vld [vmem:[%s1353 + $0x4] sm:$0xf]
        %v1356 = vld [vmem:[%s1353 + $0x8] sm:$0xf]
        %v1357 = vld [vmem:[%s1353 + $0xc] sm:$0xf]
        %v1362 = vunpack.c.l.b16 %v1354
        %v1363 = vunpack.c.l.b16 %v1355
        %v1364 = vunpack.c.l.b16 %v1356
        %v1365 = vunpack.c.l.b16 %v1357
        %v1366 = vpack.c.b16 %v1363, %v1362
        %v1367 = vpack.c.b16 %v1365, %v1364
        %v1371 = vsel %vm907, %v1352, 0
        %1373 = vmatpush.bf16.msra.mxu0 0
        %1374 = vmatpush.bf16.msra.mxu0 0
        %1375 = vmatpush.bf16.msra.mxu0 0
        %1376 = vmatpush.bf16.msra.mxu0 0
        %1377 = vmatpush.bf16.msra.mxu0 0
        %1378 = vmatpush.bf16.msra.mxu0 0
        %1379 = vmatpush.bf16.msra.mxu0 %v1367
        %1380 = vmatpush.bf16.msra.mxu0 %v1366
        %1381 = vmatmul.bf16.gmra.mxu0 %v1095
        %v1382 = vpop.f32.mrf.mxu0
        %v1383 = vadd.f32 0.0, %v1382
        %v1384 = vpop.f32.mrf.mxu0
        %v1385 = vadd.f32 0.0, %v1384
        %1386 = vmatmul.bf16.gmra.mxu0 %v1098
        %v1387 = vpop.f32.mrf.mxu0
        %v1388 = vadd.f32 0.0, %v1387
        %v1389 = vpop.f32.mrf.mxu0
        %v1390 = vadd.f32 0.0, %v1389
        %1391 = vmatmul.bf16.gmra.mxu0 %v1101
        %v1392 = vpop.f32.mrf.mxu0
        %v1393 = vadd.f32 0.0, %v1392
        %v1394 = vpop.f32.mrf.mxu0
        %v1395 = vadd.f32 0.0, %v1394
        %1396 = vmatmul.bf16.gmra.mxu0 %v1104
        %v1397 = vpop.f32.mrf.mxu0
        %v1398 = vadd.f32 0.0, %v1397
        %v1399 = vpop.f32.mrf.mxu0
        %v1400 = vadd.f32 0.0, %v1399
        %1401 = vmatmul.bf16.gmra.mxu0 %v1107
        %v1402 = vpop.f32.mrf.mxu0
        %v1403 = vadd.f32 0.0, %v1402
        %v1404 = vpop.f32.mrf.mxu0
        %v1405 = vadd.f32 0.0, %v1404
        %1406 = vmatmul.bf16.gmra.mxu0 %v1110
        %v1407 = vpop.f32.mrf.mxu0
        %v1408 = vadd.f32 0.0, %v1407
        %v1409 = vpop.f32.mrf.mxu0
        %v1410 = vadd.f32 0.0, %v1409
        %1411 = vmatmul.bf16.gmra.mxu0 %v1113
        %v1412 = vpop.f32.mrf.mxu0
        %v1413 = vadd.f32 0.0, %v1412
        %v1414 = vpop.f32.mrf.mxu0
        %v1415 = vadd.f32 0.0, %v1414
        %1416 = vmatmul.bf16.gmra.mxu0 %v1371
        %v1417 = vpop.f32.mrf.mxu0
        %v1418 = vadd.f32 0.0, %v1417
        %v1419 = vpop.f32.mrf.mxu0
        %v1420 = vadd.f32 0.0, %v1419
        %1421 = vdwg.mxu0
        %v1422 = vadd.f32 %v1336, %v1383
        %v1423 = vadd.f32 %v1337, %v1385
        %v1424 = vadd.f32 %v1338, %v1388
        %v1425 = vadd.f32 %v1339, %v1390
        %v1426 = vadd.f32 %v1340, %v1393
        %v1427 = vadd.f32 %v1341, %v1395
        %v1428 = vadd.f32 %v1342, %v1398
        %v1429 = vadd.f32 %v1343, %v1400
        %v1430 = vadd.f32 %v1344, %v1403
        %v1431 = vadd.f32 %v1345, %v1405
        %v1432 = vadd.f32 %v1346, %v1408
        %v1433 = vadd.f32 %v1347, %v1410
        %v1434 = vadd.f32 %v1348, %v1413
        %v1435 = vadd.f32 %v1349, %v1415
        %v1436 = vadd.f32 %v1350, %v1418
        %v1437 = vadd.f32 %v1351, %v1420
        %v1438 = vpack.c.bf16 %v806, %v805
        %s1439 = scalar_lea.vmem [#allocation7], 96
        %v1440 = vld [vmem:[%s1439] sm:$0xf]
        %v1441 = vld [vmem:[%s1439 + $0x4] sm:$0xf]
        %v1442 = vld [vmem:[%s1439 + $0x8] sm:$0xf]
        %v1443 = vld [vmem:[%s1439 + $0xc] sm:$0xf]
        %v1448 = vunpack.c.l.b16 %v1440
        %v1449 = vunpack.c.l.b16 %v1441
        %v1450 = vunpack.c.l.b16 %v1442
        %v1451 = vunpack.c.l.b16 %v1443
        %v1452 = vpack.c.b16 %v1449, %v1448
        %v1453 = vpack.c.b16 %v1451, %v1450
        %v1457 = vsel %vm907, %v1438, 0
        %1459 = vmatpush.bf16.msra.mxu0 0
        %1460 = vmatpush.bf16.msra.mxu0 0
        %1461 = vmatpush.bf16.msra.mxu0 0
        %1462 = vmatpush.bf16.msra.mxu0 0
        %1463 = vmatpush.bf16.msra.mxu0 0
        %1464 = vmatpush.bf16.msra.mxu0 0
        %1465 = vmatpush.bf16.msra.mxu0 %v1453
        %1466 = vmatpush.bf16.msra.mxu0 %v1452
        %1467 = vmatmul.bf16.gmra.mxu0 %v1000
        %v1468 = vpop.f32.mrf.mxu0
        %v1469 = vadd.f32 0.0, %v1468
        %v1470 = vpop.f32.mrf.mxu0
        %v1471 = vadd.f32 0.0, %v1470
        %1472 = vmatmul.bf16.gmra.mxu0 %v1003
        %v1473 = vpop.f32.mrf.mxu0
        %v1474 = vadd.f32 0.0, %v1473
        %v1475 = vpop.f32.mrf.mxu0
        %v1476 = vadd.f32 0.0, %v1475
        %1477 = vmatmul.bf16.gmra.mxu0 %v1006
        %v1478 = vpop.f32.mrf.mxu0
        %v1479 = vadd.f32 0.0, %v1478
        %v1480 = vpop.f32.mrf.mxu0
        %v1481 = vadd.f32 0.0, %v1480
        %1482 = vmatmul.bf16.gmra.mxu0 %v1009
        %v1483 = vpop.f32.mrf.mxu0
        %v1484 = vadd.f32 0.0, %v1483
        %v1485 = vpop.f32.mrf.mxu0
        %v1486 = vadd.f32 0.0, %v1485
        %1487 = vmatmul.bf16.gmra.mxu0 %v1012
        %v1488 = vpop.f32.mrf.mxu0
        %v1489 = vadd.f32 0.0, %v1488
        %v1490 = vpop.f32.mrf.mxu0
        %v1491 = vadd.f32 0.0, %v1490
        %1492 = vmatmul.bf16.gmra.mxu0 %v1015
        %v1493 = vpop.f32.mrf.mxu0
        %v1494 = vadd.f32 0.0, %v1493
        %v1495 = vpop.f32.mrf.mxu0
        %v1496 = vadd.f32 0.0, %v1495
        %1497 = vmatmul.bf16.gmra.mxu0 %v1199
        %v1498 = vpop.f32.mrf.mxu0
        %v1499 = vadd.f32 0.0, %v1498
        %v1500 = vpop.f32.mrf.mxu0
        %v1501 = vadd.f32 0.0, %v1500
        %1502 = vmatmul.bf16.gmra.mxu0 %v1457
        %v1503 = vpop.f32.mrf.mxu0
        %v1504 = vadd.f32 0.0, %v1503
        %v1505 = vpop.f32.mrf.mxu0
        %v1506 = vadd.f32 0.0, %v1505
        %1507 = vdwg.mxu0
        %v1508 = vadd.f32 %v1422, %v1469
        %v1509 = vadd.f32 %v1423, %v1471
        %v1510 = vadd.f32 %v1424, %v1474
        %v1511 = vadd.f32 %v1425, %v1476
        %v1512 = vadd.f32 %v1426, %v1479
        %v1513 = vadd.f32 %v1427, %v1481
        %v1514 = vadd.f32 %v1428, %v1484
        %v1515 = vadd.f32 %v1429, %v1486
        %v1516 = vadd.f32 %v1430, %v1489
        %v1517 = vadd.f32 %v1431, %v1491
        %v1518 = vadd.f32 %v1432, %v1494
        %v1519 = vadd.f32 %v1433, %v1496
        %v1520 = vadd.f32 %v1434, %v1499
        %v1521 = vadd.f32 %v1435, %v1501
        %v1522 = vadd.f32 %v1436, %v1504
        %v1523 = vadd.f32 %v1437, %v1506
        %v1524 = vpack.c.bf16 %v740, %v739
        %s1525 = scalar_lea.vmem [#allocation7], 112
        %v1526 = vld [vmem:[%s1525] sm:$0xf]
        %v1527 = vld [vmem:[%s1525 + $0x4] sm:$0xf]
        %v1528 = vld [vmem:[%s1525 + $0x8] sm:$0xf]
        %v1529 = vld [vmem:[%s1525 + $0xc] sm:$0xf]
        %v1534 = vunpack.c.l.b16 %v1526
        %v1535 = vunpack.c.l.b16 %v1527
        %v1536 = vunpack.c.l.b16 %v1528
        %v1537 = vunpack.c.l.b16 %v1529
        %v1538 = vpack.c.b16 %v1535, %v1534
        %v1539 = vpack.c.b16 %v1537, %v1536
        %v1543 = vsel %vm907, %v1524, 0
        %1545 = vmatpush.bf16.msra.mxu0 0
        %1546 = vmatpush.bf16.msra.mxu0 0
        %1547 = vmatpush.bf16.msra.mxu0 0
        %1548 = vmatpush.bf16.msra.mxu0 0
        %1549 = vmatpush.bf16.msra.mxu0 0
        %1550 = vmatpush.bf16.msra.mxu0 0
        %1551 = vmatpush.bf16.msra.mxu0 %v1539
        %1552 = vmatpush.bf16.msra.mxu0 %v1538
        %1553 = vmatmul.bf16.gmra.mxu0 %v915
        %v1554 = vpop.f32.mrf.mxu0
        %v1555 = vadd.f32 0.0, %v1554
        %v1556 = vpop.f32.mrf.mxu0
        %v1557 = vadd.f32 0.0, %v1556
        %1558 = vmatmul.bf16.gmra.mxu0 %v918
        %v1559 = vpop.f32.mrf.mxu0
        %v1560 = vadd.f32 0.0, %v1559
        %v1561 = vpop.f32.mrf.mxu0
        %v1562 = vadd.f32 0.0, %v1561
        %1563 = vmatmul.bf16.gmra.mxu0 %v921
        %v1564 = vpop.f32.mrf.mxu0
        %v1565 = vadd.f32 0.0, %v1564
        %v1566 = vpop.f32.mrf.mxu0
        %v1567 = vadd.f32 0.0, %v1566
        %1568 = vmatmul.bf16.gmra.mxu0 %v924
        %v1569 = vpop.f32.mrf.mxu0
        %v1570 = vadd.f32 0.0, %v1569
        %v1571 = vpop.f32.mrf.mxu0
        %v1572 = vadd.f32 0.0, %v1571
        %1573 = vmatmul.bf16.gmra.mxu0 %v927
        %v1574 = vpop.f32.mrf.mxu0
        %v1575 = vadd.f32 0.0, %v1574
        %v1576 = vpop.f32.mrf.mxu0
        %v1577 = vadd.f32 0.0, %v1576
        %1578 = vmatmul.bf16.gmra.mxu0 %v930
        %v1579 = vpop.f32.mrf.mxu0
        %v1580 = vadd.f32 0.0, %v1579
        %v1581 = vpop.f32.mrf.mxu0
        %v1582 = vadd.f32 0.0, %v1581
        %1583 = vmatmul.bf16.gmra.mxu0 %v1285
        %v1584 = vpop.f32.mrf.mxu0
        %v1585 = vadd.f32 0.0, %v1584
        %v1586 = vpop.f32.mrf.mxu0
        %v1587 = vadd.f32 0.0, %v1586
        %1588 = vmatmul.bf16.gmra.mxu0 %v1543
        %v1589 = vpop.f32.mrf.mxu0
        %v1590 = vadd.f32 0.0, %v1589
        %v1591 = vpop.f32.mrf.mxu0
        %v1592 = vadd.f32 0.0, %v1591
        %1593 = vdwg.mxu0
        %v1594 = vadd.f32 %v1508, %v1555
        %v1595 = vadd.f32 %v1509, %v1557
        %v1596 = vadd.f32 %v1510, %v1560
        %v1597 = vadd.f32 %v1511, %v1562
        %v1598 = vadd.f32 %v1512, %v1565
        %v1599 = vadd.f32 %v1513, %v1567
        %v1600 = vadd.f32 %v1514, %v1570
        %v1601 = vadd.f32 %v1515, %v1572
        %v1602 = vadd.f32 %v1516, %v1575
        %v1603 = vadd.f32 %v1517, %v1577
        %v1604 = vadd.f32 %v1518, %v1580
        %v1605 = vadd.f32 %v1519, %v1582
        %v1606 = vadd.f32 %v1520, %v1585
        %v1607 = vadd.f32 %v1521, %v1587
        %v1608 = vadd.f32 %v1522, %v1590
        %v1609 = vadd.f32 %v1523, %v1592
        %v1610 = vpack.c.bf16 %v869, %v868
        %s1611 = scalar_lea.vmem [#allocation7], 128
        %v1612 = vld [vmem:[%s1611] sm:$0xf]
        %v1613 = vld [vmem:[%s1611 + $0x4] sm:$0xf]
        %v1614 = vld [vmem:[%s1611 + $0x8] sm:$0xf]
        %v1615 = vld [vmem:[%s1611 + $0xc] sm:$0xf]
        %v1620 = vunpack.c.l.b16 %v1612
        %v1621 = vunpack.c.l.b16 %v1613
        %v1622 = vunpack.c.l.b16 %v1614
        %v1623 = vunpack.c.l.b16 %v1615
        %v1624 = vpack.c.b16 %v1621, %v1620
        %v1625 = vpack.c.b16 %v1623, %v1622
        %v1629 = vsel %vm907, %v1610, 0
        %1631 = vmatpush.bf16.msra.mxu0 0
        %1632 = vmatpush.bf16.msra.mxu0 0
        %1633 = vmatpush.bf16.msra.mxu0 0
        %1634 = vmatpush.bf16.msra.mxu0 0
        %1635 = vmatpush.bf16.msra.mxu0 0
        %1636 = vmatpush.bf16.msra.mxu0 0
        %1637 = vmatpush.bf16.msra.mxu0 %v1625
        %1638 = vmatpush.bf16.msra.mxu0 %v1624
        %1639 = vmatmul.bf16.gmra.mxu0 %v1098
        %v1640 = vpop.f32.mrf.mxu0
        %v1641 = vadd.f32 0.0, %v1640
        %v1642 = vpop.f32.mrf.mxu0
        %v1643 = vadd.f32 0.0, %v1642
        %1644 = vmatmul.bf16.gmra.mxu0 %v1101
        %v1645 = vpop.f32.mrf.mxu0
        %v1646 = vadd.f32 0.0, %v1645
        %v1647 = vpop.f32.mrf.mxu0
        %v1648 = vadd.f32 0.0, %v1647
        %1649 = vmatmul.bf16.gmra.mxu0 %v1104
        %v1650 = vpop.f32.mrf.mxu0
        %v1651 = vadd.f32 0.0, %v1650
        %v1652 = vpop.f32.mrf.mxu0
        %v1653 = vadd.f32 0.0, %v1652
        %1654 = vmatmul.bf16.gmra.mxu0 %v1107
        %v1655 = vpop.f32.mrf.mxu0
        %v1656 = vadd.f32 0.0, %v1655
        %v1657 = vpop.f32.mrf.mxu0
        %v1658 = vadd.f32 0.0, %v1657
        %1659 = vmatmul.bf16.gmra.mxu0 %v1110
        %v1660 = vpop.f32.mrf.mxu0
        %v1661 = vadd.f32 0.0, %v1660
        %v1662 = vpop.f32.mrf.mxu0
        %v1663 = vadd.f32 0.0, %v1662
        %1664 = vmatmul.bf16.gmra.mxu0 %v1113
        %v1665 = vpop.f32.mrf.mxu0
        %v1666 = vadd.f32 0.0, %v1665
        %v1667 = vpop.f32.mrf.mxu0
        %v1668 = vadd.f32 0.0, %v1667
        %1669 = vmatmul.bf16.gmra.mxu0 %v1371
        %v1670 = vpop.f32.mrf.mxu0
        %v1671 = vadd.f32 0.0, %v1670
        %v1672 = vpop.f32.mrf.mxu0
        %v1673 = vadd.f32 0.0, %v1672
        %1674 = vmatmul.bf16.gmra.mxu0 %v1629
        %v1675 = vpop.f32.mrf.mxu0
        %v1676 = vadd.f32 0.0, %v1675
        %v1677 = vpop.f32.mrf.mxu0
        %v1678 = vadd.f32 0.0, %v1677
        %1679 = vdwg.mxu0
        %v1680 = vadd.f32 %v1594, %v1641
        %v1681 = vadd.f32 %v1595, %v1643
        %v1682 = vadd.f32 %v1596, %v1646
        %v1683 = vadd.f32 %v1597, %v1648
        %v1684 = vadd.f32 %v1598, %v1651
        %v1685 = vadd.f32 %v1599, %v1653
        %v1686 = vadd.f32 %v1600, %v1656
        %v1687 = vadd.f32 %v1601, %v1658
        %v1688 = vadd.f32 %v1602, %v1661
        %v1689 = vadd.f32 %v1603, %v1663
        %v1690 = vadd.f32 %v1604, %v1666
        %v1691 = vadd.f32 %v1605, %v1668
        %v1692 = vadd.f32 %v1606, %v1671
        %v1693 = vadd.f32 %v1607, %v1673
        %v1694 = vadd.f32 %v1608, %v1676
        %v1695 = vadd.f32 %v1609, %v1678
        %v1696 = vld [vmem:[%s7] sm:$0x1]
        %v1698 = vperm.slane %v1696, 0
        %v1700 = vmul.f32 %v1680, %v1698
        %v1701 = vmul.f32 %v1681, %v1698
        %v1702 = vmul.f32 %v1682, %v1698
        %v1703 = vmul.f32 %v1683, %v1698
        %v1704 = vmul.f32 %v1684, %v1698
        %v1705 = vmul.f32 %v1685, %v1698
        %v1706 = vmul.f32 %v1686, %v1698
        %v1707 = vmul.f32 %v1687, %v1698
        %v1708 = vmul.f32 %v1688, %v1698
        %v1709 = vmul.f32 %v1689, %v1698
        %v1710 = vmul.f32 %v1690, %v1698
        %v1711 = vmul.f32 %v1691, %v1698
        %v1712 = vmul.f32 %v1692, %v1698
        %v1713 = vmul.f32 %v1693, %v1698
        %v1714 = vmul.f32 %v1694, %v1698
        %v1715 = vmul.f32 %v1695, %v1698
        %v1716 = vld [vmem:[%s8] sm:$0x1]
        %v1718 = vperm.slane %v1716, 0
        %v1720 = vadd.f32 %v1700, %v1718
        %v1721 = vadd.f32 %v1701, %v1718
        %v1722 = vadd.f32 %v1702, %v1718
        %v1723 = vadd.f32 %v1703, %v1718
        %v1724 = vadd.f32 %v1704, %v1718
        %v1725 = vadd.f32 %v1705, %v1718
        %v1726 = vadd.f32 %v1706, %v1718
        %v1727 = vadd.f32 %v1707, %v1718
        %v1728 = vadd.f32 %v1708, %v1718
        %v1729 = vadd.f32 %v1709, %v1718
        %v1730 = vadd.f32 %v1710, %v1718
        %v1731 = vadd.f32 %v1711, %v1718
        %v1732 = vadd.f32 %v1712, %v1718
        %v1733 = vadd.f32 %v1713, %v1718
        %v1734 = vadd.f32 %v1714, %v1718
        %v1735 = vadd.f32 %v1715, %v1718
        %v1736 = vmax.f32 %v1720, 0.0
        %v1737 = vmax.f32 %v1721, 0.0
        %v1738 = vmax.f32 %v1722, 0.0
        %v1739 = vmax.f32 %v1723, 0.0
        %v1740 = vmax.f32 %v1724, 0.0
        %v1741 = vmax.f32 %v1725, 0.0
        %v1742 = vmax.f32 %v1726, 0.0
        %v1743 = vmax.f32 %v1727, 0.0
        %v1744 = vmax.f32 %v1728, 0.0
        %v1745 = vmax.f32 %v1729, 0.0
        %v1746 = vmax.f32 %v1730, 0.0
        %v1747 = vmax.f32 %v1731, 0.0
        %v1748 = vmax.f32 %v1732, 0.0
        %v1749 = vmax.f32 %v1733, 0.0
        %v1750 = vmax.f32 %v1734, 0.0
        %v1751 = vmax.f32 %v1735, 0.0
        %v1752 = vpack.c.bf16 %v1737, %v1736
        %v1753 = vpack.c.bf16 %v1739, %v1738
        %v1754 = vpack.c.bf16 %v1741, %v1740
        %v1755 = vpack.c.bf16 %v1743, %v1742
        %v1756 = vpack.c.bf16 %v1745, %v1744
        %v1757 = vpack.c.bf16 %v1747, %v1746
        %v1758 = vpack.c.bf16 %v1749, %v1748
        %v1759 = vpack.c.bf16 %v1751, %v1750
        %v1760 = vld [vmem:[%s4] sm:$0xf]
        %v1761 = vld [vmem:[%s4 + $0x4] sm:$0xf]
        %v1762 = vld [vmem:[%s4 + $0x8] sm:$0xf]
        %v1763 = vld [vmem:[%s4 + $0xc] sm:$0xf]
        %v1768 = vunpack.c.l.b16 %v1760
        %v1769 = vunpack.c.l.b16 %v1761
        %v1770 = vunpack.c.l.b16 %v1762
        %v1771 = vunpack.c.l.b16 %v1763
        %v1772 = vpack.c.b16 %v1769, %v1768
        %v1773 = vpack.c.b16 %v1771, %v1770
        %v1777 = vsel %vm907, %v1752, 0
        %v1780 = vsel %vm907, %v1753, 0
        %v1783 = vsel %vm907, %v1754, 0
        %v1786 = vsel %vm907, %v1755, 0
        %v1789 = vsel %vm907, %v1756, 0
        %v1792 = vsel %vm907, %v1757, 0
        %v1795 = vsel %vm907, %v1758, 0
        %v1798 = vsel %vm907, %v1759, 0
        %1800 = vmatpush.bf16.msra.mxu0 0
        %1801 = vmatpush.bf16.msra.mxu0 0
        %1802 = vmatpush.bf16.msra.mxu0 0
        %1803 = vmatpush.bf16.msra.mxu0 0
        %1804 = vmatpush.bf16.msra.mxu0 0
        %1805 = vmatpush.bf16.msra.mxu0 0
        %1806 = vmatpush.bf16.msra.mxu0 %v1773
        %1807 = vmatpush.bf16.msra.mxu0 %v1772
        %1808 = vmatmul.bf16.gmra.mxu0 %v1777
        %v1809 = vpop.f32.mrf.mxu0
        %v1810 = vadd.f32 0.0, %v1809
        %v1811 = vpop.f32.mrf.mxu0
        %v1812 = vadd.f32 0.0, %v1811
        %1813 = vmatmul.bf16.gmra.mxu0 %v1780
        %v1814 = vpop.f32.mrf.mxu0
        %v1815 = vadd.f32 0.0, %v1814
        %v1816 = vpop.f32.mrf.mxu0
        %v1817 = vadd.f32 0.0, %v1816
        %1818 = vmatmul.bf16.gmra.mxu0 %v1783
        %v1819 = vpop.f32.mrf.mxu0
        %v1820 = vadd.f32 0.0, %v1819
        %v1821 = vpop.f32.mrf.mxu0
        %v1822 = vadd.f32 0.0, %v1821
        %1823 = vmatmul.bf16.gmra.mxu0 %v1786
        %v1824 = vpop.f32.mrf.mxu0
        %v1825 = vadd.f32 0.0, %v1824
        %v1826 = vpop.f32.mrf.mxu0
        %v1827 = vadd.f32 0.0, %v1826
        %1828 = vmatmul.bf16.gmra.mxu0 %v1789
        %v1829 = vpop.f32.mrf.mxu0
        %v1830 = vadd.f32 0.0, %v1829
        %v1831 = vpop.f32.mrf.mxu0
        %v1832 = vadd.f32 0.0, %v1831
        %1833 = vmatmul.bf16.gmra.mxu0 %v1792
        %v1834 = vpop.f32.mrf.mxu0
        %v1835 = vadd.f32 0.0, %v1834
        %v1836 = vpop.f32.mrf.mxu0
        %v1837 = vadd.f32 0.0, %v1836
        %1838 = vmatmul.bf16.gmra.mxu0 %v1795
        %v1839 = vpop.f32.mrf.mxu0
        %v1840 = vadd.f32 0.0, %v1839
        %v1841 = vpop.f32.mrf.mxu0
        %v1842 = vadd.f32 0.0, %v1841
        %1843 = vmatmul.bf16.gmra.mxu0 %v1798
        %v1844 = vpop.f32.mrf.mxu0
        %v1845 = vadd.f32 0.0, %v1844
        %v1846 = vpop.f32.mrf.mxu0
        %v1847 = vadd.f32 0.0, %v1846
        %1848 = vdwg.mxu0
        %v1849 = vld [vmem:[%s9] sm:$0x1]
        %v1851 = vperm.slane %v1849, 0
        %v1853 = vmul.f32 %v1810, %v1851
        %v1854 = vmul.f32 %v1812, %v1851
        %v1855 = vmul.f32 %v1815, %v1851
        %v1856 = vmul.f32 %v1817, %v1851
        %v1857 = vmul.f32 %v1820, %v1851
        %v1858 = vmul.f32 %v1822, %v1851
        %v1859 = vmul.f32 %v1825, %v1851
        %v1860 = vmul.f32 %v1827, %v1851
        %v1861 = vmul.f32 %v1830, %v1851
        %v1862 = vmul.f32 %v1832, %v1851
        %v1863 = vmul.f32 %v1835, %v1851
        %v1864 = vmul.f32 %v1837, %v1851
        %v1865 = vmul.f32 %v1840, %v1851
        %v1866 = vmul.f32 %v1842, %v1851
        %v1867 = vmul.f32 %v1845, %v1851
        %v1868 = vmul.f32 %v1847, %v1851
        %v1869 = vld [vmem:[%s10] sm:$0x1]
        %v1871 = vperm.slane %v1869, 0
        %v1873 = vadd.f32 %v1853, %v1871
        %v1874 = vadd.f32 %v1854, %v1871
        %v1875 = vadd.f32 %v1855, %v1871
        %v1876 = vadd.f32 %v1856, %v1871
        %v1877 = vadd.f32 %v1857, %v1871
        %v1878 = vadd.f32 %v1858, %v1871
        %v1879 = vadd.f32 %v1859, %v1871
        %v1880 = vadd.f32 %v1860, %v1871
        %v1881 = vadd.f32 %v1861, %v1871
        %v1882 = vadd.f32 %v1862, %v1871
        %v1883 = vadd.f32 %v1863, %v1871
        %v1884 = vadd.f32 %v1864, %v1871
        %v1885 = vadd.f32 %v1865, %v1871
        %v1886 = vadd.f32 %v1866, %v1871
        %v1887 = vadd.f32 %v1867, %v1871
        %v1888 = vadd.f32 %v1868, %v1871
        %v1889 = vadd.f32 %v1873, %v496
        %v1890 = vadd.f32 %v1874, %v497
        %v1891 = vadd.f32 %v1875, %v498
        %v1892 = vadd.f32 %v1876, %v499
        %v1893 = vadd.f32 %v1877, %v500
        %v1894 = vadd.f32 %v1878, %v501
        %v1895 = vadd.f32 %v1879, %v502
        %v1896 = vadd.f32 %v1880, %v503
        %v1897 = vadd.f32 %v1881, %v504
        %v1898 = vadd.f32 %v1882, %v505
        %v1899 = vadd.f32 %v1883, %v506
        %v1900 = vadd.f32 %v1884, %v507
        %v1901 = vadd.f32 %v1885, %v508
        %v1902 = vadd.f32 %v1886, %v509
        %v1903 = vadd.f32 %v1887, %v510
        %v1904 = vadd.f32 %v1888, %v511
        %v1905 = vmax.f32 %v1889, 0.0
        %v1906 = vmax.f32 %v1890, 0.0
        %v1907 = vmax.f32 %v1891, 0.0
        %v1908 = vmax.f32 %v1892, 0.0
        %v1909 = vmax.f32 %v1893, 0.0
        %v1910 = vmax.f32 %v1894, 0.0
        %v1911 = vmax.f32 %v1895, 0.0
        %v1912 = vmax.f32 %v1896, 0.0
        %v1913 = vmax.f32 %v1897, 0.0
        %v1914 = vmax.f32 %v1898, 0.0
        %v1915 = vmax.f32 %v1899, 0.0
        %v1916 = vmax.f32 %v1900, 0.0
        %v1917 = vmax.f32 %v1901, 0.0
        %v1918 = vmax.f32 %v1902, 0.0
        %v1919 = vmax.f32 %v1903, 0.0
        %v1920 = vmax.f32 %v1904, 0.0
        %1921 = vst [vmem:[%s487] sm:$0xff] %v1905
        %1922 = vst [vmem:[%s487 + $0x8] sm:$0xff] %v1906
        %1923 = vst [vmem:[%s487 + $0x10] sm:$0xff] %v1907
        %1924 = vst [vmem:[%s487 + $0x18] sm:$0xff] %v1908
        %1925 = vst [vmem:[%s487 + $0x20] sm:$0xff] %v1909
        %1926 = vst [vmem:[%s487 + $0x28] sm:$0xff] %v1910
        %1927 = vst [vmem:[%s487 + $0x30] sm:$0xff] %v1911
        %1928 = vst [vmem:[%s487 + $0x38] sm:$0xff] %v1912
        %1929 = vst [vmem:[%s487 + $0x40] sm:$0xff] %v1913
        %1930 = vst [vmem:[%s487 + $0x48] sm:$0xff] %v1914
        %1931 = vst [vmem:[%s487 + $0x50] sm:$0xff] %v1915
        %1932 = vst [vmem:[%s487 + $0x58] sm:$0xff] %v1916
        %1933 = vst [vmem:[%s487 + $0x60] sm:$0xff] %v1917
        %1934 = vst [vmem:[%s487 + $0x68] sm:$0xff] %v1918
        %1935 = vst [vmem:[%s487 + $0x70] sm:$0xff] %v1919
        %1936 = vst [vmem:[%s487 + $0x78] sm:$0xff] %v1920
        %s1937 = sand.u32 %s298, 1
        %s1938 = scalar_lea.sflag [#allocation4], %s1937
        %s1939 = sand.u32 %s298, 1
        %s1940 = smul.addr %s1939, 128
        %s1941 = scalar_lea.vmem [#allocation8], %s1940
        // Predicated region
        $region77: #{tpu_custom_call.1} parent=63 // pred_check
          %p1942 = pneg %p308
        $region78: #{tpu_custom_call.1} parent=63 // pred_check_branch
          %1944 = sbr.rel (%p1942) target = $region80
        $region79: #{tpu_custom_call.1} parent=63 // pred_region
          %s1945 = smul.u32 8, %s36
          %1947 = vsyncadd %s1938, 0
          %s1948 = smul.addr %s1945, 2
          %s1949 = smul.addr %s35, 32
          %s1950 = sadd.s32 %s1948, %s1949
          %s1951 = smul.addr %s1950, 8
          %s1952 = scalar_lea.hbm %s11, %s1951
          %s1953 = sshll.u32 %s1941, 4
          %s1954 = int_to_ptr.vmem [resolvable:$true] %s1953
          %s1955 = sshll.u32 %s1952, 4
          %s1956 = int_to_ptr.hbm [resolvable:$true] %s1955
          %1961 = dma.vmem_to_hbm [thread:$0]  %s1954, 2048, %s1956, %s1938, 128, 128, 8
        $region80: #{tpu_custom_call.1} parent=63 // pred_fallthru
          _
      $region64: #{tpu_custom_call.1} parent=5 // pred_fallthru
        _
      %p1962 = scmp.le.s32.totalorder 2, %s26
      // Predicated region
      $region81: #{tpu_custom_call.1} parent=5 // pred_check
        %p1963 = pneg %p1962
      $region82: #{tpu_custom_call.1} parent=5 // pred_check_branch
        %1965 = sbr.rel (%p1963) target = $region84
      $region83: #{tpu_custom_call.1} parent=5 // pred_region
        %s1966 = ssub.s32 %s26, 2
        // Predicated region
        $region85: #{tpu_custom_call.1} parent=83 // pred_check
          %p1967 = pneg %p314
        $region86: #{tpu_custom_call.1} parent=83 // pred_check_branch
          %1969 = sbr.rel (%p1967) target = $region88
        $region87: #{tpu_custom_call.1} parent=83 // pred_region
          %s1970 = sand.u32 %s299, 1
          %s1971 = scalar_lea.sflag [#allocation4], %s1970
          %s1972 = sand.u32 %s299, 1
          %s1973 = smul.addr %s1972, 128
          %s1974 = scalar_lea.vmem [#allocation8], %s1973
          %1976 = dma.done %s1971, 2048
        $region88: #{tpu_custom_call.1} parent=83 // pred_fallthru
          _
      $region84: #{tpu_custom_call.1} parent=5 // pred_fallthru
        _
    $region6: #{tpu_custom_call.1} parent=1 // loop_footer
      %s30 = sadd.s32 1, %s26
    $region7: #{tpu_custom_call.1} parent=1 // loop_footer_branch
      %25 = sbr.rel target = $region3
    $region8: #{tpu_custom_call.1} parent=1 // loop_exit
      _
    %1977 = vsyncpa [#allocation3], 1
    %s1978 = scalar_lea.sflag [#allocation3], 1
    %1979 = vsyncpa %s1978, 1
    %1980 = vsyncpa [#allocation6], 1
    %s1981 = scalar_lea.sflag [#allocation6], 1
    %1982 = vsyncpa %s1981, 1
    %1983 = vsyncpa [#allocation4], 1
    %s1984 = scalar_lea.sflag [#allocation4], 1
    %1985 = vsyncpa %s1984, 1

</llo_original>
